<compile_context>
chip_gen: v5e
topology: v5e:2x2
jax: 0.10.0
libtpu: 0.0.40
codegen_flags: <defaults>
</compile_context>

<pallas_src>
import functools

import jax
import jax.numpy as jnp
from jax.experimental import pallas as pl
from jax.experimental.pallas import tpu as pltpu


def _round_up(v, m):
    return (v + m - 1) // m * m


def gru_kernel(x_ref, wih_ref, whh_ref, bhn_ref, out_ref):
    """grid=(1,): fully-unrolled GRU recurrence with interleaved projection."""
    Np, Hp = out_ref.shape
    L = x_ref.shape[0] // Np
    b_hn = bhn_ref[...]                      # (1, Hp) f32, n-gate hidden bias

    def step(t, h):
        # Input projection for step t (bias folded via the constant-1 column
        # of x). Depends only on x / W_ih, so it sits off the serial chain and
        # the scheduler can issue it under the previous step's EUP latency.
        row = pl.multiple_of(t * Np, Np)
        gi = jnp.dot(x_ref[pl.ds(row, Np), :], wih_ref[...],
                     preferred_element_type=jnp.float32)      # (Np, 3*Hp) f32
        # Serial recurrent projection; whh re-loaded from VMEM each iteration
        # instead of being pinned in vregs across the whole unrolled loop.
        gh = jnp.dot(h.astype(jnp.bfloat16), whh_ref[...],
                     preferred_element_type=jnp.float32)      # (Np, 3*Hp) f32
        # Each gate occupies its own full 128-lane block -> layout-free slices.
        i_r = gi[:, 0 * Hp:1 * Hp]
        i_z = gi[:, 1 * Hp:2 * Hp]
        i_n = gi[:, 2 * Hp:3 * Hp]
        h_r = gh[:, 0 * Hp:1 * Hp]
        h_z = gh[:, 1 * Hp:2 * Hp]
        h_n = gh[:, 2 * Hp:3 * Hp]
        r = jax.nn.sigmoid(i_r + h_r)
        z = jax.nn.sigmoid(i_z + h_z)
        n = jnp.tanh(i_n + r * (h_n + b_hn))
        return (1.0 - z) * n + z * h

    h0 = jnp.zeros((Np, Hp), jnp.float32)
    hN = jax.lax.fori_loop(0, L, step, h0, unroll=True)
    out_ref[...] = hN.astype(out_ref.dtype)


def prepack_gru_params(w_ih, w_hh, b_ih, b_hh, *, input_dim, embedding_dim):
    """One-time (init-time) packing of torch-layout GRU parameters.

    Returns (wih_t, whh_t, bhn):
      wih_t: (Ip, 3*Hp) bf16 gate-major W_ih^T with the time-invariant biases
             (b_ih + b_hh for r/z, b_ih for n) folded into row `input_dim`,
             matched by a constant-1.0 column in the padded x.
      whh_t: (Hp, 3*Hp) bf16 gate-major W_hh^T.
      bhn:   (1, Hp)    f32  n-gate hidden bias (must stay in the loop since
             it is multiplied by r).
    """
    H = embedding_dim
    Ip = _round_up(input_dim + 1, 128)      # +1 column reserved for the bias
    Hp = _round_up(max(H, 128), 128)

    # Gate-major, lane-padded, transposed W_ih (torch gate order r, z, n).
    wih_g = jnp.transpose(w_ih.reshape(3, H, input_dim), (0, 2, 1))     # (3,I,H)
    wih_g = jnp.pad(wih_g, ((0, 0), (0, Ip - input_dim), (0, Hp - H)))  # (3,Ip,Hp)
    b_ih_g = b_ih.reshape(3, H)
    b_hh_g = b_hh.reshape(3, H)
    bgi = jnp.stack([b_ih_g[0] + b_hh_g[0],
                     b_ih_g[1] + b_hh_g[1],
                     b_ih_g[2]], axis=0)                                # (3, H)
    bgi = jnp.pad(bgi, ((0, 0), (0, Hp - H)))                           # (3, Hp)
    wih_g = wih_g.at[:, input_dim, :].set(bgi)                          # bias row
    wih_t = (jnp.transpose(wih_g, (1, 0, 2))
             .reshape(Ip, 3 * Hp).astype(jnp.bfloat16))                 # (Ip,3Hp)

    whh_g = jnp.transpose(w_hh.reshape(3, H, H), (0, 2, 1))             # (3,H,H)
    whh_g = jnp.pad(whh_g, ((0, 0), (0, Hp - H), (0, Hp - H)))
    whh_t = (jnp.transpose(whh_g, (1, 0, 2))
             .reshape(Hp, 3 * Hp).astype(jnp.bfloat16))                 # (Hp,3Hp)

    bhn = jnp.pad(b_hh_g[2], (0, Hp - H)).reshape(1, Hp).astype(jnp.float32)
    return wih_t, whh_t, bhn


@functools.partial(jax.jit, static_argnames=("embedding_dim",))
def rnn_block_forward(x, wih_t, whh_t, bhn, *, embedding_dim):
    """x: (N, C, L, D) + prepacked params -> hn: (N, embedding_dim)."""
    N, C, L, D = x.shape
    input_dim = C * D
    H = embedding_dim
    Np = _round_up(max(N, 8), 8)
    Ip = wih_t.shape[0]
    Hp = whh_t.shape[0]

    # permute(2,0,1,3) + flatten(-2): (L, N, input_dim); pad to (L, Np, Ip) in
    # bf16 and write the constant-1.0 bias column that matches the bias row
    # folded into wih_t at prepack time.
    x_seq = jnp.transpose(x, (2, 0, 1, 3)).reshape(L, N, input_dim)
    x_pad = jnp.pad(x_seq.astype(jnp.bfloat16),
                    ((0, 0), (0, Np - N), (0, Ip - input_dim)))
    x_pad = x_pad.at[:, :, input_dim].set(1.0)
    x_flat = x_pad.reshape(L * Np, Ip)

    # VMEM guard (v7x: 64 MiB physical / 32 MiB default scoped): resident bytes
    # ~ 2*L*Np*Ip*2 (x, double-buffered) + (Ip + Hp)*3*Hp*2 (weights) + Np*Hp*4
    # -- well under 1 MiB here. For much larger L*N, chunk the sequence with an
    # L grid axis (or pltpu.emit_pipeline) rather than growing the resident
    # block; for large N on v7x add a leading 'parallel' batch-tile grid axis
    # so the second TensorCore is used (neutral at N<=8).
    out = pl.pallas_call(
        gru_kernel,
        out_shape=jax.ShapeDtypeStruct((Np, Hp), jnp.float32),
        grid_spec=pltpu.PrefetchScalarGridSpec(
            num_scalar_prefetch=0,
            grid=(1,),
            in_specs=[
                pl.BlockSpec((L * Np, Ip), lambda i: (0, 0)),    # x (bf16, +1 col)
                pl.BlockSpec((Ip, 3 * Hp), lambda i: (0, 0)),    # W_ih^T + bias row
                pl.BlockSpec((Hp, 3 * Hp), lambda i: (0, 0)),    # W_hh^T
                pl.BlockSpec((1, Hp), lambda i: (0, 0)),         # n-gate b_hh
            ],
            out_specs=pl.BlockSpec((Np, Hp), lambda i: (0, 0)),  # hn (padded)
        ),
        compiler_params=pltpu.CompilerParams(
            dimension_semantics=("arbitrary",)),
    )(x_flat, wih_t, whh_t, bhn)
    return out[:N, :H]


def gru_reference(x, w_ih, w_hh, b_ih, b_hh, embedding_dim):
    """Pure-JAX reference matching torch.nn.GRU (single layer, h0=0)."""
    N, C, L, D = x.shape
    x_seq = jnp.transpose(x, (2, 0, 1, 3)).reshape(L, N, C * D)
    H = embedding_dim

    def step(h, x_t):
        gi = x_t @ w_ih.T + b_ih
        gh = h @ w_hh.T + b_hh
        r = jax.nn.sigmoid(gi[:, :H] + gh[:, :H])
        z = jax.nn.sigmoid(gi[:, H:2 * H] + gh[:, H:2 * H])
        n = jnp.tanh(gi[:, 2 * H:] + r * gh[:, 2 * H:])
        h_new = (1.0 - z) * n + z * h
        return h_new, None

    h0 = jnp.zeros((N, H), jnp.float32)
    hn, _ = jax.lax.scan(step, h0, x_seq)
    return hn


if __name__ == "__main__":
    # Small shapes consistent with (N, 128, LR/64, dR/64) -> here (N, C, L, D)
    N, C, L, D = 2, 4, 8, 4
    input_dim = C * D          # 16
    embedding_dim = 32

    key = jax.random.PRNGKey(0)
    k_x, k_wih, k_whh, k_bih, k_bhh = jax.random.split(key, 5)
    scale = 1.0 / jnp.sqrt(embedding_dim)  # mimics PyTorch GRU init range

    x = jax.random.normal(k_x, (N, C, L, D), dtype=jnp.float32)
    w_ih = jax.random.uniform(k_wih, (3 * embedding_dim, input_dim),
                              minval=-scale, maxval=scale, dtype=jnp.float32)
    w_hh = jax.random.uniform(k_whh, (3 * embedding_dim, embedding_dim),
                              minval=-scale, maxval=scale, dtype=jnp.float32)
    b_ih = jax.random.uniform(k_bih, (3 * embedding_dim,),
                              minval=-scale, maxval=scale, dtype=jnp.float32)
    b_hh = jax.random.uniform(k_bhh, (3 * embedding_dim,),
                              minval=-scale, maxval=scale, dtype=jnp.float32)

    # One-time, init-time weight packing (kept OUT of the per-call jit).
    wih_t, whh_t, bhn = prepack_gru_params(
        w_ih, w_hh, b_ih, b_hh,
        input_dim=input_dim, embedding_dim=embedding_dim)

    hn = rnn_block_forward(x, wih_t, whh_t, bhn, embedding_dim=embedding_dim)
    hn = jax.block_until_ready(hn)

    ref = gru_reference(x, w_ih, w_hh, b_ih, b_hh, embedding_dim)
    assert hn.shape == (N, embedding_dim), hn.shape
    # Kernel uses bf16 MXU operands with f32 accumulation; tolerance sized for
    # bf16 rounding accumulated over L=8 recurrent steps vs the f32 reference.
    assert jnp.allclose(hn, ref, atol=3e-2, rtol=3e-2), "mismatch vs JAX reference"

    print("KERNEL_OK")
</pallas_src>

<mosaic_0001>
module attributes {stable_mosaic.version = 11 : i64} {
  func.func @gru_kernel(%arg0: i32, %arg1: memref<64x128xbf16, #tpu.memory_space<vmem>>, %arg2: memref<128x384xbf16, #tpu.memory_space<vmem>>, %arg3: memref<128x384xbf16, #tpu.memory_space<vmem>>, %arg4: memref<1x128xf32, #tpu.memory_space<vmem>>, %arg5: memref<8x128xf32, #tpu.memory_space<vmem>>) attributes {dimension_semantics = [#tpu.dimension_semantics<arbitrary>], iteration_bounds = array<i64: 1>, scalar_prefetch = 0 : i64, scratch_operands = 0 : i64, tpu.core_type = #tpu.core_type<tc>, window_params = [{pipeline_mode = #tpu.pipeline_mode<synchronous>, transform_indices = @transform_0, window_bounds = array<i64: 64, 128>}, {pipeline_mode = #tpu.pipeline_mode<synchronous>, transform_indices = @transform_1, window_bounds = array<i64: 128, 384>}, {pipeline_mode = #tpu.pipeline_mode<synchronous>, transform_indices = @transform_2, window_bounds = array<i64: 128, 384>}, {pipeline_mode = #tpu.pipeline_mode<synchronous>, transform_indices = @transform_3, window_bounds = array<i64: 1, 128>}, {pipeline_mode = #tpu.pipeline_mode<synchronous>, transform_indices = @transform_4, window_bounds = array<i64: 8, 128>}]} {
    %c0 = arith.constant 0 : index
    %c0_0 = arith.constant 0 : index
    %0 = vector.load %arg4[%c0, %c0_0] : memref<1x128xf32, #tpu.memory_space<vmem>>, vector<1x128xf32>
    %cst = arith.constant 0.000000e+00 : f32
    %1 = vector.broadcast %cst : f32 to vector<8x128xf32>
    %c0_i32 = arith.constant 0 : i32
    %c8_i32 = arith.constant 8 : i32
    %2 = arith.muli %c0_i32, %c8_i32 : i32
    %3 = tpu.assume_multiple %2, 8 : i32
    %4 = arith.index_cast %3 : i32 to index
    %c0_1 = arith.constant 0 : index
    %5 = vector.load %arg1[%4, %c0_1] : memref<64x128xbf16, #tpu.memory_space<vmem>>, vector<8x128xbf16>
    %c0_2 = arith.constant 0 : index
    %c0_3 = arith.constant 0 : index
    %6 = vector.load %arg2[%c0_2, %c0_3] : memref<128x384xbf16, #tpu.memory_space<vmem>>, vector<128x384xbf16>
    %cst_4 = arith.constant dense<0.000000e+00> : vector<8x384xf32>
    %7 = tpu.matmul %5, %6, %cst_4 {dimension_numbers = #tpu.dot_dimension_numbers<[1], [0], [0], [1], [0, 0, 1, 1], [], []>} : vector<8x128xbf16>, vector<128x384xbf16>, vector<8x384xf32> -> vector<8x384xf32>
    %8 = arith.truncf %1 : vector<8x128xf32> to vector<8x128xbf16>
    %c0_5 = arith.constant 0 : index
    %c0_6 = arith.constant 0 : index
    %9 = vector.load %arg3[%c0_5, %c0_6] : memref<128x384xbf16, #tpu.memory_space<vmem>>, vector<128x384xbf16>
    %cst_7 = arith.constant dense<0.000000e+00> : vector<8x384xf32>
    %10 = tpu.matmul %8, %9, %cst_7 {dimension_numbers = #tpu.dot_dimension_numbers<[1], [0], [0], [1], [0, 0, 1, 1], [], []>} : vector<8x128xbf16>, vector<128x384xbf16>, vector<8x384xf32> -> vector<8x384xf32>
    %11 = vector.extract_strided_slice %7 {offsets = [0, 0], sizes = [8, 128], strides = [1, 1]} : vector<8x384xf32> to vector<8x128xf32>
    %12 = vector.extract_strided_slice %7 {offsets = [0, 128], sizes = [8, 128], strides = [1, 1]} : vector<8x384xf32> to vector<8x128xf32>
    %13 = vector.extract_strided_slice %7 {offsets = [0, 256], sizes = [8, 128], strides = [1, 1]} : vector<8x384xf32> to vector<8x128xf32>
    %14 = vector.extract_strided_slice %10 {offsets = [0, 0], sizes = [8, 128], strides = [1, 1]} : vector<8x384xf32> to vector<8x128xf32>
    %15 = vector.extract_strided_slice %10 {offsets = [0, 128], sizes = [8, 128], strides = [1, 1]} : vector<8x384xf32> to vector<8x128xf32>
    %16 = vector.extract_strided_slice %10 {offsets = [0, 256], sizes = [8, 128], strides = [1, 1]} : vector<8x384xf32> to vector<8x128xf32>
    %17 = arith.addf %11, %14 : vector<8x128xf32>
    %18 = arith.negf %17 : vector<8x128xf32>
    %19 = math.exp %18 : vector<8x128xf32>
    %cst_8 = arith.constant 1.000000e+00 : f32
    %20 = vector.broadcast %cst_8 : f32 to vector<8x128xf32>
    %21 = arith.addf %20, %19 : vector<8x128xf32>
    %22 = arith.divf %20, %21 : vector<8x128xf32>
    %23 = arith.addf %12, %15 : vector<8x128xf32>
    %24 = arith.negf %23 : vector<8x128xf32>
    %25 = math.exp %24 : vector<8x128xf32>
    %cst_9 = arith.constant 1.000000e+00 : f32
    %26 = vector.broadcast %cst_9 : f32 to vector<8x128xf32>
    %27 = arith.addf %26, %25 : vector<8x128xf32>
    %28 = arith.divf %26, %27 : vector<8x128xf32>
    %29 = vector.broadcast %0 : vector<1x128xf32> to vector<8x128xf32>
    %30 = arith.addf %16, %29 : vector<8x128xf32>
    %31 = arith.mulf %22, %30 : vector<8x128xf32>
    %32 = arith.addf %13, %31 : vector<8x128xf32>
    %33 = math.tanh %32 : vector<8x128xf32>
    %cst_10 = arith.constant 1.000000e+00 : f32
    %34 = vector.broadcast %cst_10 : f32 to vector<8x128xf32>
    %35 = arith.subf %34, %28 : vector<8x128xf32>
    %36 = arith.mulf %35, %33 : vector<8x128xf32>
    %37 = arith.mulf %28, %1 : vector<8x128xf32>
    %38 = arith.addf %36, %37 : vector<8x128xf32>
    %c1_i32 = arith.constant 1 : i32
    %c8_i32_11 = arith.constant 8 : i32
    %39 = arith.muli %c1_i32, %c8_i32_11 : i32
    %40 = tpu.assume_multiple %39, 8 : i32
    %41 = arith.index_cast %40 : i32 to index
    %c0_12 = arith.constant 0 : index
    %42 = vector.load %arg1[%41, %c0_12] : memref<64x128xbf16, #tpu.memory_space<vmem>>, vector<8x128xbf16>
    %c0_13 = arith.constant 0 : index
    %c0_14 = arith.constant 0 : index
    %43 = vector.load %arg2[%c0_13, %c0_14] : memref<128x384xbf16, #tpu.memory_space<vmem>>, vector<128x384xbf16>
    %cst_15 = arith.constant dense<0.000000e+00> : vector<8x384xf32>
    %44 = tpu.matmul %42, %43, %cst_15 {dimension_numbers = #tpu.dot_dimension_numbers<[1], [0], [0], [1], [0, 0, 1, 1], [], []>} : vector<8x128xbf16>, vector<128x384xbf16>, vector<8x384xf32> -> vector<8x384xf32>
    %45 = arith.truncf %38 : vector<8x128xf32> to vector<8x128xbf16>
    %c0_16 = arith.constant 0 : index
    %c0_17 = arith.constant 0 : index
    %46 = vector.load %arg3[%c0_16, %c0_17] : memref<128x384xbf16, #tpu.memory_space<vmem>>, vector<128x384xbf16>
    %cst_18 = arith.constant dense<0.000000e+00> : vector<8x384xf32>
    %47 = tpu.matmul %45, %46, %cst_18 {dimension_numbers = #tpu.dot_dimension_numbers<[1], [0], [0], [1], [0, 0, 1, 1], [], []>} : vector<8x128xbf16>, vector<128x384xbf16>, vector<8x384xf32> -> vector<8x384xf32>
    %48 = vector.extract_strided_slice %44 {offsets = [0, 0], sizes = [8, 128], strides = [1, 1]} : vector<8x384xf32> to vector<8x128xf32>
    %49 = vector.extract_strided_slice %44 {offsets = [0, 128], sizes = [8, 128], strides = [1, 1]} : vector<8x384xf32> to vector<8x128xf32>
    %50 = vector.extract_strided_slice %44 {offsets = [0, 256], sizes = [8, 128], strides = [1, 1]} : vector<8x384xf32> to vector<8x128xf32>
    %51 = vector.extract_strided_slice %47 {offsets = [0, 0], sizes = [8, 128], strides = [1, 1]} : vector<8x384xf32> to vector<8x128xf32>
    %52 = vector.extract_strided_slice %47 {offsets = [0, 128], sizes = [8, 128], strides = [1, 1]} : vector<8x384xf32> to vector<8x128xf32>
    %53 = vector.extract_strided_slice %47 {offsets = [0, 256], sizes = [8, 128], strides = [1, 1]} : vector<8x384xf32> to vector<8x128xf32>
    %54 = arith.addf %48, %51 : vector<8x128xf32>
    %55 = arith.negf %54 : vector<8x128xf32>
    %56 = math.exp %55 : vector<8x128xf32>
    %cst_19 = arith.constant 1.000000e+00 : f32
    %57 = vector.broadcast %cst_19 : f32 to vector<8x128xf32>
    %58 = arith.addf %57, %56 : vector<8x128xf32>
    %59 = arith.divf %57, %58 : vector<8x128xf32>
    %60 = arith.addf %49, %52 : vector<8x128xf32>
    %61 = arith.negf %60 : vector<8x128xf32>
    %62 = math.exp %61 : vector<8x128xf32>
    %cst_20 = arith.constant 1.000000e+00 : f32
    %63 = vector.broadcast %cst_20 : f32 to vector<8x128xf32>
    %64 = arith.addf %63, %62 : vector<8x128xf32>
    %65 = arith.divf %63, %64 : vector<8x128xf32>
    %66 = vector.broadcast %0 : vector<1x128xf32> to vector<8x128xf32>
    %67 = arith.addf %53, %66 : vector<8x128xf32>
    %68 = arith.mulf %59, %67 : vector<8x128xf32>
    %69 = arith.addf %50, %68 : vector<8x128xf32>
    %70 = math.tanh %69 : vector<8x128xf32>
    %cst_21 = arith.constant 1.000000e+00 : f32
    %71 = vector.broadcast %cst_21 : f32 to vector<8x128xf32>
    %72 = arith.subf %71, %65 : vector<8x128xf32>
    %73 = arith.mulf %72, %70 : vector<8x128xf32>
    %74 = arith.mulf %65, %38 : vector<8x128xf32>
    %75 = arith.addf %73, %74 : vector<8x128xf32>
    %c2_i32 = arith.constant 2 : i32
    %c8_i32_22 = arith.constant 8 : i32
    %76 = arith.muli %c2_i32, %c8_i32_22 : i32
    %77 = tpu.assume_multiple %76, 8 : i32
    %78 = arith.index_cast %77 : i32 to index
    %c0_23 = arith.constant 0 : index
    %79 = vector.load %arg1[%78, %c0_23] : memref<64x128xbf16, #tpu.memory_space<vmem>>, vector<8x128xbf16>
    %c0_24 = arith.constant 0 : index
    %c0_25 = arith.constant 0 : index
    %80 = vector.load %arg2[%c0_24, %c0_25] : memref<128x384xbf16, #tpu.memory_space<vmem>>, vector<128x384xbf16>
    %cst_26 = arith.constant dense<0.000000e+00> : vector<8x384xf32>
    %81 = tpu.matmul %79, %80, %cst_26 {dimension_numbers = #tpu.dot_dimension_numbers<[1], [0], [0], [1], [0, 0, 1, 1], [], []>} : vector<8x128xbf16>, vector<128x384xbf16>, vector<8x384xf32> -> vector<8x384xf32>
    %82 = arith.truncf %75 : vector<8x128xf32> to vector<8x128xbf16>
    %c0_27 = arith.constant 0 : index
    %c0_28 = arith.constant 0 : index
    %83 = vector.load %arg3[%c0_27, %c0_28] : memref<128x384xbf16, #tpu.memory_space<vmem>>, vector<128x384xbf16>
    %cst_29 = arith.constant dense<0.000000e+00> : vector<8x384xf32>
    %84 = tpu.matmul %82, %83, %cst_29 {dimension_numbers = #tpu.dot_dimension_numbers<[1], [0], [0], [1], [0, 0, 1, 1], [], []>} : vector<8x128xbf16>, vector<128x384xbf16>, vector<8x384xf32> -> vector<8x384xf32>
    %85 = vector.extract_strided_slice %81 {offsets = [0, 0], sizes = [8, 128], strides = [1, 1]} : vector<8x384xf32> to vector<8x128xf32>
    %86 = vector.extract_strided_slice %81 {offsets = [0, 128], sizes = [8, 128], strides = [1, 1]} : vector<8x384xf32> to vector<8x128xf32>
    %87 = vector.extract_strided_slice %81 {offsets = [0, 256], sizes = [8, 128], strides = [1, 1]} : vector<8x384xf32> to vector<8x128xf32>
    %88 = vector.extract_strided_slice %84 {offsets = [0, 0], sizes = [8, 128], strides = [1, 1]} : vector<8x384xf32> to vector<8x128xf32>
    %89 = vector.extract_strided_slice %84 {offsets = [0, 128], sizes = [8, 128], strides = [1, 1]} : vector<8x384xf32> to vector<8x128xf32>
    %90 = vector.extract_strided_slice %84 {offsets = [0, 256], sizes = [8, 128], strides = [1, 1]} : vector<8x384xf32> to vector<8x128xf32>
    %91 = arith.addf %85, %88 : vector<8x128xf32>
    %92 = arith.negf %91 : vector<8x128xf32>
    %93 = math.exp %92 : vector<8x128xf32>
    %cst_30 = arith.constant 1.000000e+00 : f32
    %94 = vector.broadcast %cst_30 : f32 to vector<8x128xf32>
    %95 = arith.addf %94, %93 : vector<8x128xf32>
    %96 = arith.divf %94, %95 : vector<8x128xf32>
    %97 = arith.addf %86, %89 : vector<8x128xf32>
    %98 = arith.negf %97 : vector<8x128xf32>
    %99 = math.exp %98 : vector<8x128xf32>
    %cst_31 = arith.constant 1.000000e+00 : f32
    %100 = vector.broadcast %cst_31 : f32 to vector<8x128xf32>
    %101 = arith.addf %100, %99 : vector<8x128xf32>
    %102 = arith.divf %100, %101 : vector<8x128xf32>
    %103 = vector.broadcast %0 : vector<1x128xf32> to vector<8x128xf32>
    %104 = arith.addf %90, %103 : vector<8x128xf32>
    %105 = arith.mulf %96, %104 : vector<8x128xf32>
    %106 = arith.addf %87, %105 : vector<8x128xf32>
    %107 = math.tanh %106 : vector<8x128xf32>
    %cst_32 = arith.constant 1.000000e+00 : f32
    %108 = vector.broadcast %cst_32 : f32 to vector<8x128xf32>
    %109 = arith.subf %108, %102 : vector<8x128xf32>
    %110 = arith.mulf %109, %107 : vector<8x128xf32>
    %111 = arith.mulf %102, %75 : vector<8x128xf32>
    %112 = arith.addf %110, %111 : vector<8x128xf32>
    %c3_i32 = arith.constant 3 : i32
    %c8_i32_33 = arith.constant 8 : i32
    %113 = arith.muli %c3_i32, %c8_i32_33 : i32
    %114 = tpu.assume_multiple %113, 8 : i32
    %115 = arith.index_cast %114 : i32 to index
    %c0_34 = arith.constant 0 : index
    %116 = vector.load %arg1[%115, %c0_34] : memref<64x128xbf16, #tpu.memory_space<vmem>>, vector<8x128xbf16>
    %c0_35 = arith.constant 0 : index
    %c0_36 = arith.constant 0 : index
    %117 = vector.load %arg2[%c0_35, %c0_36] : memref<128x384xbf16, #tpu.memory_space<vmem>>, vector<128x384xbf16>
    %cst_37 = arith.constant dense<0.000000e+00> : vector<8x384xf32>
    %118 = tpu.matmul %116, %117, %cst_37 {dimension_numbers = #tpu.dot_dimension_numbers<[1], [0], [0], [1], [0, 0, 1, 1], [], []>} : vector<8x128xbf16>, vector<128x384xbf16>, vector<8x384xf32> -> vector<8x384xf32>
    %119 = arith.truncf %112 : vector<8x128xf32> to vector<8x128xbf16>
    %c0_38 = arith.constant 0 : index
    %c0_39 = arith.constant 0 : index
    %120 = vector.load %arg3[%c0_38, %c0_39] : memref<128x384xbf16, #tpu.memory_space<vmem>>, vector<128x384xbf16>
    %cst_40 = arith.constant dense<0.000000e+00> : vector<8x384xf32>
    %121 = tpu.matmul %119, %120, %cst_40 {dimension_numbers = #tpu.dot_dimension_numbers<[1], [0], [0], [1], [0, 0, 1, 1], [], []>} : vector<8x128xbf16>, vector<128x384xbf16>, vector<8x384xf32> -> vector<8x384xf32>
    %122 = vector.extract_strided_slice %118 {offsets = [0, 0], sizes = [8, 128], strides = [1, 1]} : vector<8x384xf32> to vector<8x128xf32>
    %123 = vector.extract_strided_slice %118 {offsets = [0, 128], sizes = [8, 128], strides = [1, 1]} : vector<8x384xf32> to vector<8x128xf32>
    %124 = vector.extract_strided_slice %118 {offsets = [0, 256], sizes = [8, 128], strides = [1, 1]} : vector<8x384xf32> to vector<8x128xf32>
    %125 = vector.extract_strided_slice %121 {offsets = [0, 0], sizes = [8, 128], strides = [1, 1]} : vector<8x384xf32> to vector<8x128xf32>
    %126 = vector.extract_strided_slice %121 {offsets = [0, 128], sizes = [8, 128], strides = [1, 1]} : vector<8x384xf32> to vector<8x128xf32>
    %127 = vector.extract_strided_slice %121 {offsets = [0, 256], sizes = [8, 128], strides = [1, 1]} : vector<8x384xf32> to vector<8x128xf32>
    %128 = arith.addf %122, %125 : vector<8x128xf32>
    %129 = arith.negf %128 : vector<8x128xf32>
    %130 = math.exp %129 : vector<8x128xf32>
    %cst_41 = arith.constant 1.000000e+00 : f32
    %131 = vector.broadcast %cst_41 : f32 to vector<8x128xf32>
    %132 = arith.addf %131, %130 : vector<8x128xf32>
    %133 = arith.divf %131, %132 : vector<8x128xf32>
    %134 = arith.addf %123, %126 : vector<8x128xf32>
    %135 = arith.negf %134 : vector<8x128xf32>
    %136 = math.exp %135 : vector<8x128xf32>
    %cst_42 = arith.constant 1.000000e+00 : f32
    %137 = vector.broadcast %cst_42 : f32 to vector<8x128xf32>
    %138 = arith.addf %137, %136 : vector<8x128xf32>
    %139 = arith.divf %137, %138 : vector<8x128xf32>
    %140 = vector.broadcast %0 : vector<1x128xf32> to vector<8x128xf32>
    %141 = arith.addf %127, %140 : vector<8x128xf32>
    %142 = arith.mulf %133, %141 : vector<8x128xf32>
    %143 = arith.addf %124, %142 : vector<8x128xf32>
    %144 = math.tanh %143 : vector<8x128xf32>
    %cst_43 = arith.constant 1.000000e+00 : f32
    %145 = vector.broadcast %cst_43 : f32 to vector<8x128xf32>
    %146 = arith.subf %145, %139 : vector<8x128xf32>
    %147 = arith.mulf %146, %144 : vector<8x128xf32>
    %148 = arith.mulf %139, %112 : vector<8x128xf32>
    %149 = arith.addf %147, %148 : vector<8x128xf32>
    %c4_i32 = arith.constant 4 : i32
    %c8_i32_44 = arith.constant 8 : i32
    %150 = arith.muli %c4_i32, %c8_i32_44 : i32
    %151 = tpu.assume_multiple %150, 8 : i32
    %152 = arith.index_cast %151 : i32 to index
    %c0_45 = arith.constant 0 : index
    %153 = vector.load %arg1[%152, %c0_45] : memref<64x128xbf16, #tpu.memory_space<vmem>>, vector<8x128xbf16>
    %c0_46 = arith.constant 0 : index
    %c0_47 = arith.constant 0 : index
    %154 = vector.load %arg2[%c0_46, %c0_47] : memref<128x384xbf16, #tpu.memory_space<vmem>>, vector<128x384xbf16>
    %cst_48 = arith.constant dense<0.000000e+00> : vector<8x384xf32>
    %155 = tpu.matmul %153, %154, %cst_48 {dimension_numbers = #tpu.dot_dimension_numbers<[1], [0], [0], [1], [0, 0, 1, 1], [], []>} : vector<8x128xbf16>, vector<128x384xbf16>, vector<8x384xf32> -> vector<8x384xf32>
    %156 = arith.truncf %149 : vector<8x128xf32> to vector<8x128xbf16>
    %c0_49 = arith.constant 0 : index
    %c0_50 = arith.constant 0 : index
    %157 = vector.load %arg3[%c0_49, %c0_50] : memref<128x384xbf16, #tpu.memory_space<vmem>>, vector<128x384xbf16>
    %cst_51 = arith.constant dense<0.000000e+00> : vector<8x384xf32>
    %158 = tpu.matmul %156, %157, %cst_51 {dimension_numbers = #tpu.dot_dimension_numbers<[1], [0], [0], [1], [0, 0, 1, 1], [], []>} : vector<8x128xbf16>, vector<128x384xbf16>, vector<8x384xf32> -> vector<8x384xf32>
    %159 = vector.extract_strided_slice %155 {offsets = [0, 0], sizes = [8, 128], strides = [1, 1]} : vector<8x384xf32> to vector<8x128xf32>
    %160 = vector.extract_strided_slice %155 {offsets = [0, 128], sizes = [8, 128], strides = [1, 1]} : vector<8x384xf32> to vector<8x128xf32>
    %161 = vector.extract_strided_slice %155 {offsets = [0, 256], sizes = [8, 128], strides = [1, 1]} : vector<8x384xf32> to vector<8x128xf32>
    %162 = vector.extract_strided_slice %158 {offsets = [0, 0], sizes = [8, 128], strides = [1, 1]} : vector<8x384xf32> to vector<8x128xf32>
    %163 = vector.extract_strided_slice %158 {offsets = [0, 128], sizes = [8, 128], strides = [1, 1]} : vector<8x384xf32> to vector<8x128xf32>
    %164 = vector.extract_strided_slice %158 {offsets = [0, 256], sizes = [8, 128], strides = [1, 1]} : vector<8x384xf32> to vector<8x128xf32>
    %165 = arith.addf %159, %162 : vector<8x128xf32>
    %166 = arith.negf %165 : vector<8x128xf32>
    %167 = math.exp %166 : vector<8x128xf32>
    %cst_52 = arith.constant 1.000000e+00 : f32
    %168 = vector.broadcast %cst_52 : f32 to vector<8x128xf32>
    %169 = arith.addf %168, %167 : vector<8x128xf32>
    %170 = arith.divf %168, %169 : vector<8x128xf32>
    %171 = arith.addf %160, %163 : vector<8x128xf32>
    %172 = arith.negf %171 : vector<8x128xf32>
    %173 = math.exp %172 : vector<8x128xf32>
    %cst_53 = arith.constant 1.000000e+00 : f32
    %174 = vector.broadcast %cst_53 : f32 to vector<8x128xf32>
    %175 = arith.addf %174, %173 : vector<8x128xf32>
    %176 = arith.divf %174, %175 : vector<8x128xf32>
    %177 = vector.broadcast %0 : vector<1x128xf32> to vector<8x128xf32>
    %178 = arith.addf %164, %177 : vector<8x128xf32>
    %179 = arith.mulf %170, %178 : vector<8x128xf32>
    %180 = arith.addf %161, %179 : vector<8x128xf32>
    %181 = math.tanh %180 : vector<8x128xf32>
    %cst_54 = arith.constant 1.000000e+00 : f32
    %182 = vector.broadcast %cst_54 : f32 to vector<8x128xf32>
    %183 = arith.subf %182, %176 : vector<8x128xf32>
    %184 = arith.mulf %183, %181 : vector<8x128xf32>
    %185 = arith.mulf %176, %149 : vector<8x128xf32>
    %186 = arith.addf %184, %185 : vector<8x128xf32>
    %c5_i32 = arith.constant 5 : i32
    %c8_i32_55 = arith.constant 8 : i32
    %187 = arith.muli %c5_i32, %c8_i32_55 : i32
    %188 = tpu.assume_multiple %187, 8 : i32
    %189 = arith.index_cast %188 : i32 to index
    %c0_56 = arith.constant 0 : index
    %190 = vector.load %arg1[%189, %c0_56] : memref<64x128xbf16, #tpu.memory_space<vmem>>, vector<8x128xbf16>
    %c0_57 = arith.constant 0 : index
    %c0_58 = arith.constant 0 : index
    %191 = vector.load %arg2[%c0_57, %c0_58] : memref<128x384xbf16, #tpu.memory_space<vmem>>, vector<128x384xbf16>
    %cst_59 = arith.constant dense<0.000000e+00> : vector<8x384xf32>
    %192 = tpu.matmul %190, %191, %cst_59 {dimension_numbers = #tpu.dot_dimension_numbers<[1], [0], [0], [1], [0, 0, 1, 1], [], []>} : vector<8x128xbf16>, vector<128x384xbf16>, vector<8x384xf32> -> vector<8x384xf32>
    %193 = arith.truncf %186 : vector<8x128xf32> to vector<8x128xbf16>
    %c0_60 = arith.constant 0 : index
    %c0_61 = arith.constant 0 : index
    %194 = vector.load %arg3[%c0_60, %c0_61] : memref<128x384xbf16, #tpu.memory_space<vmem>>, vector<128x384xbf16>
    %cst_62 = arith.constant dense<0.000000e+00> : vector<8x384xf32>
    %195 = tpu.matmul %193, %194, %cst_62 {dimension_numbers = #tpu.dot_dimension_numbers<[1], [0], [0], [1], [0, 0, 1, 1], [], []>} : vector<8x128xbf16>, vector<128x384xbf16>, vector<8x384xf32> -> vector<8x384xf32>
    %196 = vector.extract_strided_slice %192 {offsets = [0, 0], sizes = [8, 128], strides = [1, 1]} : vector<8x384xf32> to vector<8x128xf32>
    %197 = vector.extract_strided_slice %192 {offsets = [0, 128], sizes = [8, 128], strides = [1, 1]} : vector<8x384xf32> to vector<8x128xf32>
    %198 = vector.extract_strided_slice %192 {offsets = [0, 256], sizes = [8, 128], strides = [1, 1]} : vector<8x384xf32> to vector<8x128xf32>
    %199 = vector.extract_strided_slice %195 {offsets = [0, 0], sizes = [8, 128], strides = [1, 1]} : vector<8x384xf32> to vector<8x128xf32>
    %200 = vector.extract_strided_slice %195 {offsets = [0, 128], sizes = [8, 128], strides = [1, 1]} : vector<8x384xf32> to vector<8x128xf32>
    %201 = vector.extract_strided_slice %195 {offsets = [0, 256], sizes = [8, 128], strides = [1, 1]} : vector<8x384xf32> to vector<8x128xf32>
    %202 = arith.addf %196, %199 : vector<8x128xf32>
    %203 = arith.negf %202 : vector<8x128xf32>
    %204 = math.exp %203 : vector<8x128xf32>
    %cst_63 = arith.constant 1.000000e+00 : f32
    %205 = vector.broadcast %cst_63 : f32 to vector<8x128xf32>
    %206 = arith.addf %205, %204 : vector<8x128xf32>
    %207 = arith.divf %205, %206 : vector<8x128xf32>
    %208 = arith.addf %197, %200 : vector<8x128xf32>
    %209 = arith.negf %208 : vector<8x128xf32>
    %210 = math.exp %209 : vector<8x128xf32>
    %cst_64 = arith.constant 1.000000e+00 : f32
    %211 = vector.broadcast %cst_64 : f32 to vector<8x128xf32>
    %212 = arith.addf %211, %210 : vector<8x128xf32>
    %213 = arith.divf %211, %212 : vector<8x128xf32>
    %214 = vector.broadcast %0 : vector<1x128xf32> to vector<8x128xf32>
    %215 = arith.addf %201, %214 : vector<8x128xf32>
    %216 = arith.mulf %207, %215 : vector<8x128xf32>
    %217 = arith.addf %198, %216 : vector<8x128xf32>
    %218 = math.tanh %217 : vector<8x128xf32>
    %cst_65 = arith.constant 1.000000e+00 : f32
    %219 = vector.broadcast %cst_65 : f32 to vector<8x128xf32>
    %220 = arith.subf %219, %213 : vector<8x128xf32>
    %221 = arith.mulf %220, %218 : vector<8x128xf32>
    %222 = arith.mulf %213, %186 : vector<8x128xf32>
    %223 = arith.addf %221, %222 : vector<8x128xf32>
    %c6_i32 = arith.constant 6 : i32
    %c8_i32_66 = arith.constant 8 : i32
    %224 = arith.muli %c6_i32, %c8_i32_66 : i32
    %225 = tpu.assume_multiple %224, 8 : i32
    %226 = arith.index_cast %225 : i32 to index
    %c0_67 = arith.constant 0 : index
    %227 = vector.load %arg1[%226, %c0_67] : memref<64x128xbf16, #tpu.memory_space<vmem>>, vector<8x128xbf16>
    %c0_68 = arith.constant 0 : index
    %c0_69 = arith.constant 0 : index
    %228 = vector.load %arg2[%c0_68, %c0_69] : memref<128x384xbf16, #tpu.memory_space<vmem>>, vector<128x384xbf16>
    %cst_70 = arith.constant dense<0.000000e+00> : vector<8x384xf32>
    %229 = tpu.matmul %227, %228, %cst_70 {dimension_numbers = #tpu.dot_dimension_numbers<[1], [0], [0], [1], [0, 0, 1, 1], [], []>} : vector<8x128xbf16>, vector<128x384xbf16>, vector<8x384xf32> -> vector<8x384xf32>
    %230 = arith.truncf %223 : vector<8x128xf32> to vector<8x128xbf16>
    %c0_71 = arith.constant 0 : index
    %c0_72 = arith.constant 0 : index
    %231 = vector.load %arg3[%c0_71, %c0_72] : memref<128x384xbf16, #tpu.memory_space<vmem>>, vector<128x384xbf16>
    %cst_73 = arith.constant dense<0.000000e+00> : vector<8x384xf32>
    %232 = tpu.matmul %230, %231, %cst_73 {dimension_numbers = #tpu.dot_dimension_numbers<[1], [0], [0], [1], [0, 0, 1, 1], [], []>} : vector<8x128xbf16>, vector<128x384xbf16>, vector<8x384xf32> -> vector<8x384xf32>
    %233 = vector.extract_strided_slice %229 {offsets = [0, 0], sizes = [8, 128], strides = [1, 1]} : vector<8x384xf32> to vector<8x128xf32>
    %234 = vector.extract_strided_slice %229 {offsets = [0, 128], sizes = [8, 128], strides = [1, 1]} : vector<8x384xf32> to vector<8x128xf32>
    %235 = vector.extract_strided_slice %229 {offsets = [0, 256], sizes = [8, 128], strides = [1, 1]} : vector<8x384xf32> to vector<8x128xf32>
    %236 = vector.extract_strided_slice %232 {offsets = [0, 0], sizes = [8, 128], strides = [1, 1]} : vector<8x384xf32> to vector<8x128xf32>
    %237 = vector.extract_strided_slice %232 {offsets = [0, 128], sizes = [8, 128], strides = [1, 1]} : vector<8x384xf32> to vector<8x128xf32>
    %238 = vector.extract_strided_slice %232 {offsets = [0, 256], sizes = [8, 128], strides = [1, 1]} : vector<8x384xf32> to vector<8x128xf32>
    %239 = arith.addf %233, %236 : vector<8x128xf32>
    %240 = arith.negf %239 : vector<8x128xf32>
    %241 = math.exp %240 : vector<8x128xf32>
    %cst_74 = arith.constant 1.000000e+00 : f32
    %242 = vector.broadcast %cst_74 : f32 to vector<8x128xf32>
    %243 = arith.addf %242, %241 : vector<8x128xf32>
    %244 = arith.divf %242, %243 : vector<8x128xf32>
    %245 = arith.addf %234, %237 : vector<8x128xf32>
    %246 = arith.negf %245 : vector<8x128xf32>
    %247 = math.exp %246 : vector<8x128xf32>
    %cst_75 = arith.constant 1.000000e+00 : f32
    %248 = vector.broadcast %cst_75 : f32 to vector<8x128xf32>
    %249 = arith.addf %248, %247 : vector<8x128xf32>
    %250 = arith.divf %248, %249 : vector<8x128xf32>
    %251 = vector.broadcast %0 : vector<1x128xf32> to vector<8x128xf32>
    %252 = arith.addf %238, %251 : vector<8x128xf32>
    %253 = arith.mulf %244, %252 : vector<8x128xf32>
    %254 = arith.addf %235, %253 : vector<8x128xf32>
    %255 = math.tanh %254 : vector<8x128xf32>
    %cst_76 = arith.constant 1.000000e+00 : f32
    %256 = vector.broadcast %cst_76 : f32 to vector<8x128xf32>
    %257 = arith.subf %256, %250 : vector<8x128xf32>
    %258 = arith.mulf %257, %255 : vector<8x128xf32>
    %259 = arith.mulf %250, %223 : vector<8x128xf32>
    %260 = arith.addf %258, %259 : vector<8x128xf32>
    %c7_i32 = arith.constant 7 : i32
    %c8_i32_77 = arith.constant 8 : i32
    %261 = arith.muli %c7_i32, %c8_i32_77 : i32
    %262 = tpu.assume_multiple %261, 8 : i32
    %263 = arith.index_cast %262 : i32 to index
    %c0_78 = arith.constant 0 : index
    %264 = vector.load %arg1[%263, %c0_78] : memref<64x128xbf16, #tpu.memory_space<vmem>>, vector<8x128xbf16>
    %c0_79 = arith.constant 0 : index
    %c0_80 = arith.constant 0 : index
    %265 = vector.load %arg2[%c0_79, %c0_80] : memref<128x384xbf16, #tpu.memory_space<vmem>>, vector<128x384xbf16>
    %cst_81 = arith.constant dense<0.000000e+00> : vector<8x384xf32>
    %266 = tpu.matmul %264, %265, %cst_81 {dimension_numbers = #tpu.dot_dimension_numbers<[1], [0], [0], [1], [0, 0, 1, 1], [], []>} : vector<8x128xbf16>, vector<128x384xbf16>, vector<8x384xf32> -> vector<8x384xf32>
    %267 = arith.truncf %260 : vector<8x128xf32> to vector<8x128xbf16>
    %c0_82 = arith.constant 0 : index
    %c0_83 = arith.constant 0 : index
    %268 = vector.load %arg3[%c0_82, %c0_83] : memref<128x384xbf16, #tpu.memory_space<vmem>>, vector<128x384xbf16>
    %cst_84 = arith.constant dense<0.000000e+00> : vector<8x384xf32>
    %269 = tpu.matmul %267, %268, %cst_84 {dimension_numbers = #tpu.dot_dimension_numbers<[1], [0], [0], [1], [0, 0, 1, 1], [], []>} : vector<8x128xbf16>, vector<128x384xbf16>, vector<8x384xf32> -> vector<8x384xf32>
    %270 = vector.extract_strided_slice %266 {offsets = [0, 0], sizes = [8, 128], strides = [1, 1]} : vector<8x384xf32> to vector<8x128xf32>
    %271 = vector.extract_strided_slice %266 {offsets = [0, 128], sizes = [8, 128], strides = [1, 1]} : vector<8x384xf32> to vector<8x128xf32>
    %272 = vector.extract_strided_slice %266 {offsets = [0, 256], sizes = [8, 128], strides = [1, 1]} : vector<8x384xf32> to vector<8x128xf32>
    %273 = vector.extract_strided_slice %269 {offsets = [0, 0], sizes = [8, 128], strides = [1, 1]} : vector<8x384xf32> to vector<8x128xf32>
    %274 = vector.extract_strided_slice %269 {offsets = [0, 128], sizes = [8, 128], strides = [1, 1]} : vector<8x384xf32> to vector<8x128xf32>
    %275 = vector.extract_strided_slice %269 {offsets = [0, 256], sizes = [8, 128], strides = [1, 1]} : vector<8x384xf32> to vector<8x128xf32>
    %276 = arith.addf %270, %273 : vector<8x128xf32>
    %277 = arith.negf %276 : vector<8x128xf32>
    %278 = math.exp %277 : vector<8x128xf32>
    %cst_85 = arith.constant 1.000000e+00 : f32
    %279 = vector.broadcast %cst_85 : f32 to vector<8x128xf32>
    %280 = arith.addf %279, %278 : vector<8x128xf32>
    %281 = arith.divf %279, %280 : vector<8x128xf32>
    %282 = arith.addf %271, %274 : vector<8x128xf32>
    %283 = arith.negf %282 : vector<8x128xf32>
    %284 = math.exp %283 : vector<8x128xf32>
    %cst_86 = arith.constant 1.000000e+00 : f32
    %285 = vector.broadcast %cst_86 : f32 to vector<8x128xf32>
    %286 = arith.addf %285, %284 : vector<8x128xf32>
    %287 = arith.divf %285, %286 : vector<8x128xf32>
    %288 = vector.broadcast %0 : vector<1x128xf32> to vector<8x128xf32>
    %289 = arith.addf %275, %288 : vector<8x128xf32>
    %290 = arith.mulf %281, %289 : vector<8x128xf32>
    %291 = arith.addf %272, %290 : vector<8x128xf32>
    %292 = math.tanh %291 : vector<8x128xf32>
    %cst_87 = arith.constant 1.000000e+00 : f32
    %293 = vector.broadcast %cst_87 : f32 to vector<8x128xf32>
    %294 = arith.subf %293, %287 : vector<8x128xf32>
    %295 = arith.mulf %294, %292 : vector<8x128xf32>
    %296 = arith.mulf %287, %260 : vector<8x128xf32>
    %297 = arith.addf %295, %296 : vector<8x128xf32>
    %c8_i32_88 = arith.constant 8 : i32
    %c0_89 = arith.constant 0 : index
    %c0_90 = arith.constant 0 : index
    %298 = vector.load %arg5[%c0_89, %c0_90] : memref<8x128xf32, #tpu.memory_space<vmem>>, vector<8x128xf32>
    tpu.vector_store %arg5[%c0_89, %c0_90], %297 {strides = array<i32>} : memref<8x128xf32, #tpu.memory_space<vmem>>, vector<8x128xf32>,
    return
  }
  func.func @transform_0(%arg0: i32) -> (i32, i32) {
    %c0_i32 = arith.constant 0 : i32
    %c0_i32_0 = arith.constant 0 : i32
    %c0_i32_1 = arith.constant 0 : i32
    return %c0_i32, %c0_i32_0 : i32, i32
  }
  func.func @transform_1(%arg0: i32) -> (i32, i32) {
    %c0_i32 = arith.constant 0 : i32
    %c0_i32_0 = arith.constant 0 : i32
    %c0_i32_1 = arith.constant 0 : i32
    return %c0_i32, %c0_i32_0 : i32, i32
  }
  func.func @transform_2(%arg0: i32) -> (i32, i32) {
    %c0_i32 = arith.constant 0 : i32
    %c0_i32_0 = arith.constant 0 : i32
    %c0_i32_1 = arith.constant 0 : i32
    return %c0_i32, %c0_i32_0 : i32, i32
  }
  func.func @transform_3(%arg0: i32) -> (i32, i32) {
    %c0_i32 = arith.constant 0 : i32
    %c0_i32_0 = arith.constant 0 : i32
    %c0_i32_1 = arith.constant 0 : i32
    return %c0_i32, %c0_i32_0 : i32, i32
  }
  func.func @transform_4(%arg0: i32) -> (i32, i32) {
    %c0_i32 = arith.constant 0 : i32
    %c0_i32_0 = arith.constant 0 : i32
    %c0_i32_1 = arith.constant 0 : i32
    return %c0_i32, %c0_i32_0 : i32, i32
  }
}

</mosaic_0001>

<llo_original>
// kernel: rnn_block_forward.1
$region0: #{rnn_block_forward.1}
  #allocation0 [shape = 'u32[]', space=smem, size = 0x4, offset = 0x4, fixed_abs, tag = 'smem constant byte address 0x4 - core index']
  #allocation1 [shape = 'u32[72,128]{1,0:T(1,128)}', space=vmem, size = 0x9000, scoped, tag = 'internal scratch']
  %s0 = inlined_call_operand.vmem [shape: bf16[64,128], index: 0, kind: input, shape index: {}]
  %s1 = inlined_call_operand.vmem [shape: bf16[128,384], index: 1, kind: input, shape index: {}]
  %s2 = inlined_call_operand.hbm [shape: bf16[128,384], index: 2, kind: input, shape index: {}]
  %s3 = inlined_call_operand.vmem [shape: f32[1,128], index: 3, kind: input, shape index: {}]
  %s4 = inlined_call_operand.vmem [shape: f32[8,128], index: 4, kind: output, shape index: {}]
  %s5 = sld [smem:[#allocation0]]
  $region30: #{rnn_block_forward.1} parent=0
    _
  %s7 = ssub.s32 1, %s5
  %s8 = scalar_select 0, %s7, %s5
  $region1: #{rnn_block_forward.1} parent=0
    #allocation2 [shape = 'u8[98304]{0}', space=vmem, size = 0x18000, scoped, tag = 'input window, operand 2, single buffered']
    #allocation3 [shape = 's32[1]{0}', space=sflag, size = 0x4, scoped, tag = 'scoped memory for rnn_block_forward.1']
    %9 = vsyncpa [#allocation3], 0
    // Predicated region
    $region2: #{rnn_block_forward.1} parent=1 // pred_check
      _
    $region3: #{rnn_block_forward.1} parent=1 // pred_check_branch
      %11 = sbr.rel (0) target = $region5
    $region4: #{rnn_block_forward.1} parent=1 // pred_region
      _
    $region5: #{rnn_block_forward.1} parent=1 // pred_fallthru
      _
    // Predicated region
    $region6: #{rnn_block_forward.1} parent=1 // pred_check
      _
    $region7: #{rnn_block_forward.1} parent=1 // pred_check_branch
      %13 = sbr.rel (0) target = $region9
    $region8: #{rnn_block_forward.1} parent=1 // pred_region
      _
    $region9: #{rnn_block_forward.1} parent=1 // pred_fallthru
      _
    // Predicated region
    $region10: #{rnn_block_forward.1} parent=1 // pred_check
      _
    $region11: #{rnn_block_forward.1} parent=1 // pred_check_branch
      %15 = sbr.rel (0) target = $region13
    $region12: #{rnn_block_forward.1} parent=1 // pred_region
      %17 = vsyncadd [#allocation3], 0
      %s18 = sshll.u32 %s2, 4
      %s19 = int_to_ptr.hbm [resolvable:$true] %s18
      %s20 = sshll.u32 [#allocation2], 4
      %s21 = int_to_ptr.vmem [resolvable:$true] %s20
      %26 = dma.hbm_to_vmem [thread:$0]  %s19, 3072, %s21, [#allocation3], 192, 192, 12
    $region13: #{rnn_block_forward.1} parent=1 // pred_fallthru
      _
    // Predicated region
    $region14: #{rnn_block_forward.1} parent=1 // pred_check
      _
    $region15: #{rnn_block_forward.1} parent=1 // pred_check_branch
      %28 = sbr.rel (0) target = $region17
    $region16: #{rnn_block_forward.1} parent=1 // pred_region
      _
    $region17: #{rnn_block_forward.1} parent=1 // pred_fallthru
      _
    // Predicated region
    $region18: #{rnn_block_forward.1} parent=1 // pred_check
      _
    $region19: #{rnn_block_forward.1} parent=1 // pred_check_branch
      %30 = sbr.rel (0) target = $region21
    $region20: #{rnn_block_forward.1} parent=1 // pred_region
      %32 = dma.done [#allocation3], 3072
    $region21: #{rnn_block_forward.1} parent=1 // pred_fallthru
      _
    %v34 = vld [vmem:[%s3] sm:$0x1]
    %v35 = vld [vmem:[%s0] sm:$0xf]
    %v36 = vld [vmem:[%s1] sm:$0xff]
    %v37 = vld [vmem:[%s1 + $0x8] sm:$0xf]
    %v38 = vld [vmem:[%s1 + $0xc] sm:$0xff]
    %v39 = vld [vmem:[%s1 + $0x14] sm:$0xf]
    %v40 = vld [vmem:[%s1 + $0x18] sm:$0xff]
    %v41 = vld [vmem:[%s1 + $0x20] sm:$0xf]
    %v42 = vld [vmem:[%s1 + $0x24] sm:$0xff]
    %v43 = vld [vmem:[%s1 + $0x2c] sm:$0xf]
    %v44 = vld [vmem:[%s1 + $0x30] sm:$0xff]
    %v45 = vld [vmem:[%s1 + $0x38] sm:$0xf]
    %v46 = vld [vmem:[%s1 + $0x3c] sm:$0xff]
    %v47 = vld [vmem:[%s1 + $0x44] sm:$0xf]
    %v48 = vld [vmem:[%s1 + $0x48] sm:$0xff]
    %v49 = vld [vmem:[%s1 + $0x50] sm:$0xf]
    %v50 = vld [vmem:[%s1 + $0x54] sm:$0xff]
    %v51 = vld [vmem:[%s1 + $0x5c] sm:$0xf]
    %v52 = vld [vmem:[%s1 + $0x60] sm:$0xff]
    %v53 = vld [vmem:[%s1 + $0x68] sm:$0xf]
    %v54 = vld [vmem:[%s1 + $0x6c] sm:$0xff]
    %v55 = vld [vmem:[%s1 + $0x74] sm:$0xf]
    %v56 = vld [vmem:[%s1 + $0x78] sm:$0xff]
    %v57 = vld [vmem:[%s1 + $0x80] sm:$0xf]
    %v58 = vld [vmem:[%s1 + $0x84] sm:$0xff]
    %v59 = vld [vmem:[%s1 + $0x8c] sm:$0xf]
    %v60 = vld [vmem:[%s1 + $0x90] sm:$0xff]
    %v61 = vld [vmem:[%s1 + $0x98] sm:$0xf]
    %v62 = vld [vmem:[%s1 + $0x9c] sm:$0xff]
    %v63 = vld [vmem:[%s1 + $0xa4] sm:$0xf]
    %v64 = vld [vmem:[%s1 + $0xa8] sm:$0xff]
    %v65 = vld [vmem:[%s1 + $0xb0] sm:$0xf]
    %v66 = vld [vmem:[%s1 + $0xb4] sm:$0xff]
    %v67 = vld [vmem:[%s1 + $0xbc] sm:$0xf]
    %v100 = vunpack.c.l.b16 %v36
    %v101 = vunpack.c.h.b16 %v36
    %v102 = vunpack.c.l.b16 %v37
    %v103 = vunpack.c.l.b16 %v38
    %v104 = vunpack.c.h.b16 %v38
    %v105 = vunpack.c.l.b16 %v39
    %v106 = vunpack.c.l.b16 %v40
    %v107 = vunpack.c.h.b16 %v40
    %v108 = vunpack.c.l.b16 %v41
    %v109 = vunpack.c.l.b16 %v42
    %v110 = vunpack.c.h.b16 %v42
    %v111 = vunpack.c.l.b16 %v43
    %v112 = vunpack.c.l.b16 %v44
    %v113 = vunpack.c.h.b16 %v44
    %v114 = vunpack.c.l.b16 %v45
    %v115 = vunpack.c.l.b16 %v46
    %v116 = vunpack.c.h.b16 %v46
    %v117 = vunpack.c.l.b16 %v47
    %v118 = vunpack.c.l.b16 %v48
    %v119 = vunpack.c.h.b16 %v48
    %v120 = vunpack.c.l.b16 %v49
    %v121 = vunpack.c.l.b16 %v50
    %v122 = vunpack.c.h.b16 %v50
    %v123 = vunpack.c.l.b16 %v51
    %v124 = vunpack.c.l.b16 %v52
    %v125 = vunpack.c.h.b16 %v52
    %v126 = vunpack.c.l.b16 %v53
    %v127 = vunpack.c.l.b16 %v54
    %v128 = vunpack.c.h.b16 %v54
    %v129 = vunpack.c.l.b16 %v55
    %v130 = vunpack.c.l.b16 %v56
    %v131 = vunpack.c.h.b16 %v56
    %v132 = vunpack.c.l.b16 %v57
    %v133 = vunpack.c.l.b16 %v58
    %v134 = vunpack.c.h.b16 %v58
    %v135 = vunpack.c.l.b16 %v59
    %v136 = vunpack.c.l.b16 %v60
    %v137 = vunpack.c.h.b16 %v60
    %v138 = vunpack.c.l.b16 %v61
    %v139 = vunpack.c.l.b16 %v62
    %v140 = vunpack.c.h.b16 %v62
    %v141 = vunpack.c.l.b16 %v63
    %v142 = vunpack.c.l.b16 %v64
    %v143 = vunpack.c.h.b16 %v64
    %v144 = vunpack.c.l.b16 %v65
    %v145 = vunpack.c.l.b16 %v66
    %v146 = vunpack.c.h.b16 %v66
    %v147 = vunpack.c.l.b16 %v67
    %v148 = vpack.c.b16 %v103, %v100
    %v149 = vpack.c.b16 %v104, %v101
    %v150 = vpack.c.b16 %v105, %v102
    %v151 = vpack.c.b16 %v109, %v106
    %v152 = vpack.c.b16 %v110, %v107
    %v153 = vpack.c.b16 %v111, %v108
    %v154 = vpack.c.b16 %v115, %v112
    %v155 = vpack.c.b16 %v116, %v113
    %v156 = vpack.c.b16 %v117, %v114
    %v157 = vpack.c.b16 %v121, %v118
    %v158 = vpack.c.b16 %v122, %v119
    %v159 = vpack.c.b16 %v123, %v120
    %v160 = vpack.c.b16 %v127, %v124
    %v161 = vpack.c.b16 %v128, %v125
    %v162 = vpack.c.b16 %v129, %v126
    %v163 = vpack.c.b16 %v133, %v130
    %v164 = vpack.c.b16 %v134, %v131
    %v165 = vpack.c.b16 %v135, %v132
    %v166 = vpack.c.b16 %v139, %v136
    %v167 = vpack.c.b16 %v140, %v137
    %v168 = vpack.c.b16 %v141, %v138
    %v169 = vpack.c.b16 %v145, %v142
    %v170 = vpack.c.b16 %v146, %v143
    %v171 = vpack.c.b16 %v147, %v144
    %196 = vmatpush.bf16.msra.mxu0 %v169
    %197 = vmatpush.bf16.msra.mxu0 %v166
    %198 = vmatpush.bf16.msra.mxu0 %v163
    %199 = vmatpush.bf16.msra.mxu0 %v160
    %200 = vmatpush.bf16.msra.mxu0 %v157
    %201 = vmatpush.bf16.msra.mxu0 %v154
    %202 = vmatpush.bf16.msra.mxu0 %v151
    %203 = vmatpush.bf16.msra.mxu0 %v148
    %204 = vmatmul.bf16.gmra.mxu0 %v35
    %v205 = vpop.f32.mrf.mxu0
    %v206 = vadd.f32 0.0, %v205
    %v207 = vpop.f32.mrf.mxu0
    %208 = vdwg.mxu0
    %209 = vmatpush.bf16.msra.mxu0 %v170
    %210 = vmatpush.bf16.msra.mxu0 %v167
    %211 = vmatpush.bf16.msra.mxu0 %v164
    %212 = vmatpush.bf16.msra.mxu0 %v161
    %213 = vmatpush.bf16.msra.mxu0 %v158
    %214 = vmatpush.bf16.msra.mxu0 %v155
    %215 = vmatpush.bf16.msra.mxu0 %v152
    %216 = vmatpush.bf16.msra.mxu0 %v149
    %217 = vmatmul.bf16.gmra.mxu0 %v35
    %v218 = vpop.f32.mrf.mxu0
    %v219 = vadd.f32 0.0, %v218
    %v220 = vpop.f32.mrf.mxu0
    %221 = vdwg.mxu0
    %222 = vmatpush.bf16.msra.mxu0 %v171
    %223 = vmatpush.bf16.msra.mxu0 %v168
    %224 = vmatpush.bf16.msra.mxu0 %v165
    %225 = vmatpush.bf16.msra.mxu0 %v162
    %226 = vmatpush.bf16.msra.mxu0 %v159
    %227 = vmatpush.bf16.msra.mxu0 %v156
    %228 = vmatpush.bf16.msra.mxu0 %v153
    %229 = vmatpush.bf16.msra.mxu0 %v150
    %230 = vmatmul.bf16.gmra.mxu0 %v35
    %v231 = vpop.f32.mrf.mxu0
    %v232 = vadd.f32 0.0, %v231
    %v233 = vpop.f32.mrf.mxu0
    %234 = vdwg.mxu0
    %v235 = vld [vmem:[#allocation2] sm:$0xff]
    %v236 = vld [vmem:[#allocation2 + $0x8] sm:$0xf]
    %v237 = vld [vmem:[#allocation2 + $0xc] sm:$0xff]
    %v238 = vld [vmem:[#allocation2 + $0x14] sm:$0xf]
    %v239 = vld [vmem:[#allocation2 + $0x18] sm:$0xff]
    %v240 = vld [vmem:[#allocation2 + $0x20] sm:$0xf]
    %v241 = vld [vmem:[#allocation2 + $0x24] sm:$0xff]
    %v242 = vld [vmem:[#allocation2 + $0x2c] sm:$0xf]
    %v243 = vld [vmem:[#allocation2 + $0x30] sm:$0xff]
    %v244 = vld [vmem:[#allocation2 + $0x38] sm:$0xf]
    %v245 = vld [vmem:[#allocation2 + $0x3c] sm:$0xff]
    %v246 = vld [vmem:[#allocation2 + $0x44] sm:$0xf]
    %v247 = vld [vmem:[#allocation2 + $0x48] sm:$0xff]
    %v248 = vld [vmem:[#allocation2 + $0x50] sm:$0xf]
    %v249 = vld [vmem:[#allocation2 + $0x54] sm:$0xff]
    %v250 = vld [vmem:[#allocation2 + $0x5c] sm:$0xf]
    %v251 = vld [vmem:[#allocation2 + $0x60] sm:$0xff]
    %v252 = vld [vmem:[#allocation2 + $0x68] sm:$0xf]
    %v253 = vld [vmem:[#allocation2 + $0x6c] sm:$0xff]
    %v254 = vld [vmem:[#allocation2 + $0x74] sm:$0xf]
    %v255 = vld [vmem:[#allocation2 + $0x78] sm:$0xff]
    %v256 = vld [vmem:[#allocation2 + $0x80] sm:$0xf]
    %v257 = vld [vmem:[#allocation2 + $0x84] sm:$0xff]
    %v258 = vld [vmem:[#allocation2 + $0x8c] sm:$0xf]
    %v259 = vld [vmem:[#allocation2 + $0x90] sm:$0xff]
    %v260 = vld [vmem:[#allocation2 + $0x98] sm:$0xf]
    %v261 = vld [vmem:[#allocation2 + $0x9c] sm:$0xff]
    %v262 = vld [vmem:[#allocation2 + $0xa4] sm:$0xf]
    %v263 = vld [vmem:[#allocation2 + $0xa8] sm:$0xff]
    %v264 = vld [vmem:[#allocation2 + $0xb0] sm:$0xf]
    %v265 = vld [vmem:[#allocation2 + $0xb4] sm:$0xff]
    %v266 = vld [vmem:[#allocation2 + $0xbc] sm:$0xf]
    %v299 = vunpack.c.l.b16 %v235
    %v300 = vunpack.c.h.b16 %v235
    %v301 = vunpack.c.l.b16 %v236
    %v302 = vunpack.c.l.b16 %v237
    %v303 = vunpack.c.h.b16 %v237
    %v304 = vunpack.c.l.b16 %v238
    %v305 = vunpack.c.l.b16 %v239
    %v306 = vunpack.c.h.b16 %v239
    %v307 = vunpack.c.l.b16 %v240
    %v308 = vunpack.c.l.b16 %v241
    %v309 = vunpack.c.h.b16 %v241
    %v310 = vunpack.c.l.b16 %v242
    %v311 = vunpack.c.l.b16 %v243
    %v312 = vunpack.c.h.b16 %v243
    %v313 = vunpack.c.l.b16 %v244
    %v314 = vunpack.c.l.b16 %v245
    %v315 = vunpack.c.h.b16 %v245
    %v316 = vunpack.c.l.b16 %v246
    %v317 = vunpack.c.l.b16 %v247
    %v318 = vunpack.c.h.b16 %v247
    %v319 = vunpack.c.l.b16 %v248
    %v320 = vunpack.c.l.b16 %v249
    %v321 = vunpack.c.h.b16 %v249
    %v322 = vunpack.c.l.b16 %v250
    %v323 = vunpack.c.l.b16 %v251
    %v324 = vunpack.c.h.b16 %v251
    %v325 = vunpack.c.l.b16 %v252
    %v326 = vunpack.c.l.b16 %v253
    %v327 = vunpack.c.h.b16 %v253
    %v328 = vunpack.c.l.b16 %v254
    %v329 = vunpack.c.l.b16 %v255
    %v330 = vunpack.c.h.b16 %v255
    %v331 = vunpack.c.l.b16 %v256
    %v332 = vunpack.c.l.b16 %v257
    %v333 = vunpack.c.h.b16 %v257
    %v334 = vunpack.c.l.b16 %v258
    %v335 = vunpack.c.l.b16 %v259
    %v336 = vunpack.c.h.b16 %v259
    %v337 = vunpack.c.l.b16 %v260
    %v338 = vunpack.c.l.b16 %v261
    %v339 = vunpack.c.h.b16 %v261
    %v340 = vunpack.c.l.b16 %v262
    %v341 = vunpack.c.l.b16 %v263
    %v342 = vunpack.c.h.b16 %v263
    %v343 = vunpack.c.l.b16 %v264
    %v344 = vunpack.c.l.b16 %v265
    %v345 = vunpack.c.h.b16 %v265
    %v346 = vunpack.c.l.b16 %v266
    %v347 = vpack.c.b16 %v302, %v299
    %v348 = vpack.c.b16 %v303, %v300
    %v349 = vpack.c.b16 %v304, %v301
    %v350 = vpack.c.b16 %v308, %v305
    %v351 = vpack.c.b16 %v309, %v306
    %v352 = vpack.c.b16 %v310, %v307
    %v353 = vpack.c.b16 %v314, %v311
    %v354 = vpack.c.b16 %v315, %v312
    %v355 = vpack.c.b16 %v316, %v313
    %v356 = vpack.c.b16 %v320, %v317
    %v357 = vpack.c.b16 %v321, %v318
    %v358 = vpack.c.b16 %v322, %v319
    %v359 = vpack.c.b16 %v326, %v323
    %v360 = vpack.c.b16 %v327, %v324
    %v361 = vpack.c.b16 %v328, %v325
    %v362 = vpack.c.b16 %v332, %v329
    %v363 = vpack.c.b16 %v333, %v330
    %v364 = vpack.c.b16 %v334, %v331
    %v365 = vpack.c.b16 %v338, %v335
    %v366 = vpack.c.b16 %v339, %v336
    %v367 = vpack.c.b16 %v340, %v337
    %v368 = vpack.c.b16 %v344, %v341
    %v369 = vpack.c.b16 %v345, %v342
    %v370 = vpack.c.b16 %v346, %v343
    %395 = vmatpush.bf16.msra.mxu0 %v368
    %396 = vmatpush.bf16.msra.mxu0 %v365
    %397 = vmatpush.bf16.msra.mxu0 %v362
    %398 = vmatpush.bf16.msra.mxu0 %v359
    %399 = vmatpush.bf16.msra.mxu0 %v356
    %400 = vmatpush.bf16.msra.mxu0 %v353
    %401 = vmatpush.bf16.msra.mxu0 %v350
    %402 = vmatpush.bf16.msra.mxu0 %v347
    %403 = vmatmul.bf16.gmra.mxu0 0
    %v404 = vpop.f32.mrf.mxu0
    %v405 = vadd.f32 0.0, %v404
    %v406 = vpop.f32.mrf.mxu0
    %407 = vdwg.mxu0
    %408 = vmatpush.bf16.msra.mxu0 %v369
    %409 = vmatpush.bf16.msra.mxu0 %v366
    %410 = vmatpush.bf16.msra.mxu0 %v363
    %411 = vmatpush.bf16.msra.mxu0 %v360
    %412 = vmatpush.bf16.msra.mxu0 %v357
    %413 = vmatpush.bf16.msra.mxu0 %v354
    %414 = vmatpush.bf16.msra.mxu0 %v351
    %415 = vmatpush.bf16.msra.mxu0 %v348
    %416 = vmatmul.bf16.gmra.mxu0 0
    %v417 = vpop.f32.mrf.mxu0
    %v418 = vadd.f32 0.0, %v417
    %v419 = vpop.f32.mrf.mxu0
    %420 = vdwg.mxu0
    %421 = vmatpush.bf16.msra.mxu0 %v370
    %422 = vmatpush.bf16.msra.mxu0 %v367
    %423 = vmatpush.bf16.msra.mxu0 %v364
    %424 = vmatpush.bf16.msra.mxu0 %v361
    %425 = vmatpush.bf16.msra.mxu0 %v358
    %426 = vmatpush.bf16.msra.mxu0 %v355
    %427 = vmatpush.bf16.msra.mxu0 %v352
    %428 = vmatpush.bf16.msra.mxu0 %v349
    %429 = vmatmul.bf16.gmra.mxu0 0
    %v430 = vpop.f32.mrf.mxu0
    %v431 = vadd.f32 0.0, %v430
    %v432 = vpop.f32.mrf.mxu0
    %433 = vdwg.mxu0
    %v434 = vadd.f32 %v206, %v405
    %v435 = vxor.u32 %v434, 2147483648
    %v436 = vmul.f32 %v435, 1.442695
    %v437 = vpow.pop %v436
    %v438 = vadd.f32 %v437, 1.0
    %v439 = vrcp.pop %v438
    %v440 = vmul.f32 %v438, %v439
    %v441 = vsub.f32 1.0, %v440
    %v442 = vmul.f32 %v439, %v441
    %v443 = vadd.f32 %v439, %v442
    %vm444 = vweird.f32 %v438
    %vm445 = vweird.f32 %v439
    %vm446 = vmor %vm444, %vm445
    %v447 = vsel %vm446, %v439, %v443
    %v448 = vand.u32 2147483647, %v438
    %vm449 = vcmp.eq.f32.partialorder %v448, 8.507059e+37
    %v450 = vand.u32 %v438, 2147483648
    %v451 = vor.u32 1.1754944e-38, %v450
    %v452 = vsel %vm449, %v451, %v447
    %v453 = vmul.f32 1.0, %v452
    %v454 = vadd.f32 %v219, %v418
    %v455 = vxor.u32 %v454, 2147483648
    %v456 = vmul.f32 %v455, 1.442695
    %v457 = vpow.pop %v456
    %v458 = vadd.f32 %v457, 1.0
    %v459 = vrcp.pop %v458
    %v460 = vmul.f32 %v458, %v459
    %v461 = vsub.f32 1.0, %v460
    %v462 = vmul.f32 %v459, %v461
    %v463 = vadd.f32 %v459, %v462
    %vm464 = vweird.f32 %v458
    %vm465 = vweird.f32 %v459
    %vm466 = vmor %vm464, %vm465
    %v467 = vsel %vm466, %v459, %v463
    %v468 = vand.u32 2147483647, %v458
    %vm469 = vcmp.eq.f32.partialorder %v468, 8.507059e+37
    %v470 = vand.u32 %v458, 2147483648
    %v471 = vor.u32 1.1754944e-38, %v470
    %v472 = vsel %vm469, %v471, %v467
    %v473 = vmul.f32 1.0, %v472
    %v475 = vperm.slane %v34, 0
    %v477 = vadd.f32 %v431, %v475
    %v478 = vmul.f32 %v453, %v477
    %v479 = vadd.f32 %v232, %v478
    %v480 = vtanh.pop %v479
    %v481 = vsub.f32 1.0, %v473
    %v482 = vmul.f32 %v481, %v480
    %v483 = vmul.f32 %v473, 0.0
    %v484 = vadd.f32 %v482, %v483
    %s485 = scalar_lea.vmem %s0, 4
    %v486 = vld [vmem:[%s485] sm:$0xf]
    %487 = vmatpush.bf16.msra.mxu0 %v169
    %488 = vmatpush.bf16.msra.mxu0 %v166
    %489 = vmatpush.bf16.msra.mxu0 %v163
    %490 = vmatpush.bf16.msra.mxu0 %v160
    %491 = vmatpush.bf16.msra.mxu0 %v157
    %492 = vmatpush.bf16.msra.mxu0 %v154
    %493 = vmatpush.bf16.msra.mxu0 %v151
    %494 = vmatpush.bf16.msra.mxu0 %v148
    %495 = vmatmul.bf16.gmra.mxu0 %v486
    %v496 = vpop.f32.mrf.mxu0
    %v497 = vadd.f32 0.0, %v496
    %v498 = vpop.f32.mrf.mxu0
    %499 = vdwg.mxu0
    %500 = vmatpush.bf16.msra.mxu0 %v170
    %501 = vmatpush.bf16.msra.mxu0 %v167
    %502 = vmatpush.bf16.msra.mxu0 %v164
    %503 = vmatpush.bf16.msra.mxu0 %v161
    %504 = vmatpush.bf16.msra.mxu0 %v158
    %505 = vmatpush.bf16.msra.mxu0 %v155
    %506 = vmatpush.bf16.msra.mxu0 %v152
    %507 = vmatpush.bf16.msra.mxu0 %v149
    %508 = vmatmul.bf16.gmra.mxu0 %v486
    %v509 = vpop.f32.mrf.mxu0
    %v510 = vadd.f32 0.0, %v509
    %v511 = vpop.f32.mrf.mxu0
    %512 = vdwg.mxu0
    %513 = vmatpush.bf16.msra.mxu0 %v171
    %514 = vmatpush.bf16.msra.mxu0 %v168
    %515 = vmatpush.bf16.msra.mxu0 %v165
    %516 = vmatpush.bf16.msra.mxu0 %v162
    %517 = vmatpush.bf16.msra.mxu0 %v159
    %518 = vmatpush.bf16.msra.mxu0 %v156
    %519 = vmatpush.bf16.msra.mxu0 %v153
    %520 = vmatpush.bf16.msra.mxu0 %v150
    %521 = vmatmul.bf16.gmra.mxu0 %v486
    %v522 = vpop.f32.mrf.mxu0
    %v523 = vadd.f32 0.0, %v522
    %v524 = vpop.f32.mrf.mxu0
    %525 = vdwg.mxu0
    %v526 = vpack.c.bf16 %v484, %v484
    %527 = vmatpush.bf16.msra.mxu0 %v368
    %528 = vmatpush.bf16.msra.mxu0 %v365
    %529 = vmatpush.bf16.msra.mxu0 %v362
    %530 = vmatpush.bf16.msra.mxu0 %v359
    %531 = vmatpush.bf16.msra.mxu0 %v356
    %532 = vmatpush.bf16.msra.mxu0 %v353
    %533 = vmatpush.bf16.msra.mxu0 %v350
    %534 = vmatpush.bf16.msra.mxu0 %v347
    %535 = vmatmul.bf16.gmra.mxu0 %v526
    %v536 = vpop.f32.mrf.mxu0
    %v537 = vadd.f32 0.0, %v536
    %v538 = vpop.f32.mrf.mxu0
    %539 = vdwg.mxu0
    %540 = vmatpush.bf16.msra.mxu0 %v369
    %541 = vmatpush.bf16.msra.mxu0 %v366
    %542 = vmatpush.bf16.msra.mxu0 %v363
    %543 = vmatpush.bf16.msra.mxu0 %v360
    %544 = vmatpush.bf16.msra.mxu0 %v357
    %545 = vmatpush.bf16.msra.mxu0 %v354
    %546 = vmatpush.bf16.msra.mxu0 %v351
    %547 = vmatpush.bf16.msra.mxu0 %v348
    %548 = vmatmul.bf16.gmra.mxu0 %v526
    %v549 = vpop.f32.mrf.mxu0
    %v550 = vadd.f32 0.0, %v549
    %v551 = vpop.f32.mrf.mxu0
    %552 = vdwg.mxu0
    %553 = vmatpush.bf16.msra.mxu0 %v370
    %554 = vmatpush.bf16.msra.mxu0 %v367
    %555 = vmatpush.bf16.msra.mxu0 %v364
    %556 = vmatpush.bf16.msra.mxu0 %v361
    %557 = vmatpush.bf16.msra.mxu0 %v358
    %558 = vmatpush.bf16.msra.mxu0 %v355
    %559 = vmatpush.bf16.msra.mxu0 %v352
    %560 = vmatpush.bf16.msra.mxu0 %v349
    %561 = vmatmul.bf16.gmra.mxu0 %v526
    %v562 = vpop.f32.mrf.mxu0
    %v563 = vadd.f32 0.0, %v562
    %v564 = vpop.f32.mrf.mxu0
    %565 = vdwg.mxu0
    %v566 = vadd.f32 %v497, %v537
    %v567 = vxor.u32 %v566, 2147483648
    %v568 = vmul.f32 %v567, 1.442695
    %v569 = vpow.pop %v568
    %v570 = vadd.f32 %v569, 1.0
    %v571 = vrcp.pop %v570
    %v572 = vmul.f32 %v570, %v571
    %v573 = vsub.f32 1.0, %v572
    %v574 = vmul.f32 %v571, %v573
    %v575 = vadd.f32 %v571, %v574
    %vm576 = vweird.f32 %v570
    %vm577 = vweird.f32 %v571
    %vm578 = vmor %vm576, %vm577
    %v579 = vsel %vm578, %v571, %v575
    %v580 = vand.u32 2147483647, %v570
    %vm581 = vcmp.eq.f32.partialorder %v580, 8.507059e+37
    %v582 = vand.u32 %v570, 2147483648
    %v583 = vor.u32 1.1754944e-38, %v582
    %v584 = vsel %vm581, %v583, %v579
    %v585 = vmul.f32 1.0, %v584
    %v586 = vadd.f32 %v510, %v550
    %v587 = vxor.u32 %v586, 2147483648
    %v588 = vmul.f32 %v587, 1.442695
    %v589 = vpow.pop %v588
    %v590 = vadd.f32 %v589, 1.0
    %v591 = vrcp.pop %v590
    %v592 = vmul.f32 %v590, %v591
    %v593 = vsub.f32 1.0, %v592
    %v594 = vmul.f32 %v591, %v593
    %v595 = vadd.f32 %v591, %v594
    %vm596 = vweird.f32 %v590
    %vm597 = vweird.f32 %v591
    %vm598 = vmor %vm596, %vm597
    %v599 = vsel %vm598, %v591, %v595
    %v600 = vand.u32 2147483647, %v590
    %vm601 = vcmp.eq.f32.partialorder %v600, 8.507059e+37
    %v602 = vand.u32 %v590, 2147483648
    %v603 = vor.u32 1.1754944e-38, %v602
    %v604 = vsel %vm601, %v603, %v599
    %v605 = vmul.f32 1.0, %v604
    %v606 = vadd.f32 %v563, %v475
    %v607 = vmul.f32 %v585, %v606
    %v608 = vadd.f32 %v523, %v607
    %v609 = vtanh.pop %v608
    %v610 = vsub.f32 1.0, %v605
    %v611 = vmul.f32 %v610, %v609
    %v612 = vmul.f32 %v605, %v484
    %v613 = vadd.f32 %v611, %v612
    %s614 = scalar_lea.vmem %s0, 8
    %v615 = vld [vmem:[%s614] sm:$0xf]
    %616 = vmatpush.bf16.msra.mxu0 %v169
    %617 = vmatpush.bf16.msra.mxu0 %v166
    %618 = vmatpush.bf16.msra.mxu0 %v163
    %619 = vmatpush.bf16.msra.mxu0 %v160
    %620 = vmatpush.bf16.msra.mxu0 %v157
    %621 = vmatpush.bf16.msra.mxu0 %v154
    %622 = vmatpush.bf16.msra.mxu0 %v151
    %623 = vmatpush.bf16.msra.mxu0 %v148
    %624 = vmatmul.bf16.gmra.mxu0 %v615
    %v625 = vpop.f32.mrf.mxu0
    %v626 = vadd.f32 0.0, %v625
    %v627 = vpop.f32.mrf.mxu0
    %628 = vdwg.mxu0
    %629 = vmatpush.bf16.msra.mxu0 %v170
    %630 = vmatpush.bf16.msra.mxu0 %v167
    %631 = vmatpush.bf16.msra.mxu0 %v164
    %632 = vmatpush.bf16.msra.mxu0 %v161
    %633 = vmatpush.bf16.msra.mxu0 %v158
    %634 = vmatpush.bf16.msra.mxu0 %v155
    %635 = vmatpush.bf16.msra.mxu0 %v152
    %636 = vmatpush.bf16.msra.mxu0 %v149
    %637 = vmatmul.bf16.gmra.mxu0 %v615
    %v638 = vpop.f32.mrf.mxu0
    %v639 = vadd.f32 0.0, %v638
    %v640 = vpop.f32.mrf.mxu0
    %641 = vdwg.mxu0
    %642 = vmatpush.bf16.msra.mxu0 %v171
    %643 = vmatpush.bf16.msra.mxu0 %v168
    %644 = vmatpush.bf16.msra.mxu0 %v165
    %645 = vmatpush.bf16.msra.mxu0 %v162
    %646 = vmatpush.bf16.msra.mxu0 %v159
    %647 = vmatpush.bf16.msra.mxu0 %v156
    %648 = vmatpush.bf16.msra.mxu0 %v153
    %649 = vmatpush.bf16.msra.mxu0 %v150
    %650 = vmatmul.bf16.gmra.mxu0 %v615
    %v651 = vpop.f32.mrf.mxu0
    %v652 = vadd.f32 0.0, %v651
    %v653 = vpop.f32.mrf.mxu0
    %654 = vdwg.mxu0
    %v655 = vpack.c.bf16 %v613, %v613
    %656 = vmatpush.bf16.msra.mxu0 %v368
    %657 = vmatpush.bf16.msra.mxu0 %v365
    %658 = vmatpush.bf16.msra.mxu0 %v362
    %659 = vmatpush.bf16.msra.mxu0 %v359
    %660 = vmatpush.bf16.msra.mxu0 %v356
    %661 = vmatpush.bf16.msra.mxu0 %v353
    %662 = vmatpush.bf16.msra.mxu0 %v350
    %663 = vmatpush.bf16.msra.mxu0 %v347
    %664 = vmatmul.bf16.gmra.mxu0 %v655
    %v665 = vpop.f32.mrf.mxu0
    %v666 = vadd.f32 0.0, %v665
    %v667 = vpop.f32.mrf.mxu0
    %668 = vdwg.mxu0
    %669 = vmatpush.bf16.msra.mxu0 %v369
    %670 = vmatpush.bf16.msra.mxu0 %v366
    %671 = vmatpush.bf16.msra.mxu0 %v363
    %672 = vmatpush.bf16.msra.mxu0 %v360
    %673 = vmatpush.bf16.msra.mxu0 %v357
    %674 = vmatpush.bf16.msra.mxu0 %v354
    %675 = vmatpush.bf16.msra.mxu0 %v351
    %676 = vmatpush.bf16.msra.mxu0 %v348
    %677 = vmatmul.bf16.gmra.mxu0 %v655
    %v678 = vpop.f32.mrf.mxu0
    %v679 = vadd.f32 0.0, %v678
    %v680 = vpop.f32.mrf.mxu0
    %681 = vdwg.mxu0
    %682 = vmatpush.bf16.msra.mxu0 %v370
    %683 = vmatpush.bf16.msra.mxu0 %v367
    %684 = vmatpush.bf16.msra.mxu0 %v364
    %685 = vmatpush.bf16.msra.mxu0 %v361
    %686 = vmatpush.bf16.msra.mxu0 %v358
    %687 = vmatpush.bf16.msra.mxu0 %v355
    %688 = vmatpush.bf16.msra.mxu0 %v352
    %689 = vmatpush.bf16.msra.mxu0 %v349
    %690 = vmatmul.bf16.gmra.mxu0 %v655
    %v691 = vpop.f32.mrf.mxu0
    %v692 = vadd.f32 0.0, %v691
    %v693 = vpop.f32.mrf.mxu0
    %694 = vdwg.mxu0
    %v695 = vadd.f32 %v626, %v666
    %v696 = vxor.u32 %v695, 2147483648
    %v697 = vmul.f32 %v696, 1.442695
    %v698 = vpow.pop %v697
    %v699 = vadd.f32 %v698, 1.0
    %v700 = vrcp.pop %v699
    %v701 = vmul.f32 %v699, %v700
    %v702 = vsub.f32 1.0, %v701
    %v703 = vmul.f32 %v700, %v702
    %v704 = vadd.f32 %v700, %v703
    %vm705 = vweird.f32 %v699
    %vm706 = vweird.f32 %v700
    %vm707 = vmor %vm705, %vm706
    %v708 = vsel %vm707, %v700, %v704
    %v709 = vand.u32 2147483647, %v699
    %vm710 = vcmp.eq.f32.partialorder %v709, 8.507059e+37
    %v711 = vand.u32 %v699, 2147483648
    %v712 = vor.u32 1.1754944e-38, %v711
    %v713 = vsel %vm710, %v712, %v708
    %v714 = vmul.f32 1.0, %v713
    %v715 = vadd.f32 %v639, %v679
    %v716 = vxor.u32 %v715, 2147483648
    %v717 = vmul.f32 %v716, 1.442695
    %v718 = vpow.pop %v717
    %v719 = vadd.f32 %v718, 1.0
    %v720 = vrcp.pop %v719
    %v721 = vmul.f32 %v719, %v720
    %v722 = vsub.f32 1.0, %v721
    %v723 = vmul.f32 %v720, %v722
    %v724 = vadd.f32 %v720, %v723
    %vm725 = vweird.f32 %v719
    %vm726 = vweird.f32 %v720
    %vm727 = vmor %vm725, %vm726
    %v728 = vsel %vm727, %v720, %v724
    %v729 = vand.u32 2147483647, %v719
    %vm730 = vcmp.eq.f32.partialorder %v729, 8.507059e+37
    %v731 = vand.u32 %v719, 2147483648
    %v732 = vor.u32 1.1754944e-38, %v731
    %v733 = vsel %vm730, %v732, %v728
    %v734 = vmul.f32 1.0, %v733
    %v735 = vadd.f32 %v692, %v475
    %v736 = vmul.f32 %v714, %v735
    %v737 = vadd.f32 %v652, %v736
    %v738 = vtanh.pop %v737
    %v739 = vsub.f32 1.0, %v734
    %v740 = vmul.f32 %v739, %v738
    %v741 = vmul.f32 %v734, %v613
    %v742 = vadd.f32 %v740, %v741
    %s743 = scalar_lea.vmem %s0, 12
    %v744 = vld [vmem:[%s743] sm:$0xf]
    %745 = vmatpush.bf16.msra.mxu0 %v169
    %746 = vmatpush.bf16.msra.mxu0 %v166
    %747 = vmatpush.bf16.msra.mxu0 %v163
    %748 = vmatpush.bf16.msra.mxu0 %v160
    %749 = vmatpush.bf16.msra.mxu0 %v157
    %750 = vmatpush.bf16.msra.mxu0 %v154
    %751 = vmatpush.bf16.msra.mxu0 %v151
    %752 = vmatpush.bf16.msra.mxu0 %v148
    %753 = vmatmul.bf16.gmra.mxu0 %v744
    %v754 = vpop.f32.mrf.mxu0
    %v755 = vadd.f32 0.0, %v754
    %v756 = vpop.f32.mrf.mxu0
    %757 = vdwg.mxu0
    %758 = vmatpush.bf16.msra.mxu0 %v170
    %759 = vmatpush.bf16.msra.mxu0 %v167
    %760 = vmatpush.bf16.msra.mxu0 %v164
    %761 = vmatpush.bf16.msra.mxu0 %v161
    %762 = vmatpush.bf16.msra.mxu0 %v158
    %763 = vmatpush.bf16.msra.mxu0 %v155
    %764 = vmatpush.bf16.msra.mxu0 %v152
    %765 = vmatpush.bf16.msra.mxu0 %v149
    %766 = vmatmul.bf16.gmra.mxu0 %v744
    %v767 = vpop.f32.mrf.mxu0
    %v768 = vadd.f32 0.0, %v767
    %v769 = vpop.f32.mrf.mxu0
    %770 = vdwg.mxu0
    %771 = vmatpush.bf16.msra.mxu0 %v171
    %772 = vmatpush.bf16.msra.mxu0 %v168
    %773 = vmatpush.bf16.msra.mxu0 %v165
    %774 = vmatpush.bf16.msra.mxu0 %v162
    %775 = vmatpush.bf16.msra.mxu0 %v159
    %776 = vmatpush.bf16.msra.mxu0 %v156
    %777 = vmatpush.bf16.msra.mxu0 %v153
    %778 = vmatpush.bf16.msra.mxu0 %v150
    %779 = vmatmul.bf16.gmra.mxu0 %v744
    %v780 = vpop.f32.mrf.mxu0
    %v781 = vadd.f32 0.0, %v780
    %v782 = vpop.f32.mrf.mxu0
    %783 = vdwg.mxu0
    %v784 = vpack.c.bf16 %v742, %v742
    %785 = vmatpush.bf16.msra.mxu0 %v368
    %786 = vmatpush.bf16.msra.mxu0 %v365
    %787 = vmatpush.bf16.msra.mxu0 %v362
    %788 = vmatpush.bf16.msra.mxu0 %v359
    %789 = vmatpush.bf16.msra.mxu0 %v356
    %790 = vmatpush.bf16.msra.mxu0 %v353
    %791 = vmatpush.bf16.msra.mxu0 %v350
    %792 = vmatpush.bf16.msra.mxu0 %v347
    %793 = vmatmul.bf16.gmra.mxu0 %v784
    %v794 = vpop.f32.mrf.mxu0
    %v795 = vadd.f32 0.0, %v794
    %v796 = vpop.f32.mrf.mxu0
    %797 = vdwg.mxu0
    %798 = vmatpush.bf16.msra.mxu0 %v369
    %799 = vmatpush.bf16.msra.mxu0 %v366
    %800 = vmatpush.bf16.msra.mxu0 %v363
    %801 = vmatpush.bf16.msra.mxu0 %v360
    %802 = vmatpush.bf16.msra.mxu0 %v357
    %803 = vmatpush.bf16.msra.mxu0 %v354
    %804 = vmatpush.bf16.msra.mxu0 %v351
    %805 = vmatpush.bf16.msra.mxu0 %v348
    %806 = vmatmul.bf16.gmra.mxu0 %v784
    %v807 = vpop.f32.mrf.mxu0
    %v808 = vadd.f32 0.0, %v807
    %v809 = vpop.f32.mrf.mxu0
    %810 = vdwg.mxu0
    %811 = vmatpush.bf16.msra.mxu0 %v370
    %812 = vmatpush.bf16.msra.mxu0 %v367
    %813 = vmatpush.bf16.msra.mxu0 %v364
    %814 = vmatpush.bf16.msra.mxu0 %v361
    %815 = vmatpush.bf16.msra.mxu0 %v358
    %816 = vmatpush.bf16.msra.mxu0 %v355
    %817 = vmatpush.bf16.msra.mxu0 %v352
    %818 = vmatpush.bf16.msra.mxu0 %v349
    %819 = vmatmul.bf16.gmra.mxu0 %v784
    %v820 = vpop.f32.mrf.mxu0
    %v821 = vadd.f32 0.0, %v820
    %v822 = vpop.f32.mrf.mxu0
    %823 = vdwg.mxu0
    %v824 = vadd.f32 %v755, %v795
    %v825 = vxor.u32 %v824, 2147483648
    %v826 = vmul.f32 %v825, 1.442695
    %v827 = vpow.pop %v826
    %v828 = vadd.f32 %v827, 1.0
    %v829 = vrcp.pop %v828
    %v830 = vmul.f32 %v828, %v829
    %v831 = vsub.f32 1.0, %v830
    %v832 = vmul.f32 %v829, %v831
    %v833 = vadd.f32 %v829, %v832
    %vm834 = vweird.f32 %v828
    %vm835 = vweird.f32 %v829
    %vm836 = vmor %vm834, %vm835
    %v837 = vsel %vm836, %v829, %v833
    %v838 = vand.u32 2147483647, %v828
    %vm839 = vcmp.eq.f32.partialorder %v838, 8.507059e+37
    %v840 = vand.u32 %v828, 2147483648
    %v841 = vor.u32 1.1754944e-38, %v840
    %v842 = vsel %vm839, %v841, %v837
    %v843 = vmul.f32 1.0, %v842
    %v844 = vadd.f32 %v768, %v808
    %v845 = vxor.u32 %v844, 2147483648
    %v846 = vmul.f32 %v845, 1.442695
    %v847 = vpow.pop %v846
    %v848 = vadd.f32 %v847, 1.0
    %v849 = vrcp.pop %v848
    %v850 = vmul.f32 %v848, %v849
    %v851 = vsub.f32 1.0, %v850
    %v852 = vmul.f32 %v849, %v851
    %v853 = vadd.f32 %v849, %v852
    %vm854 = vweird.f32 %v848
    %vm855 = vweird.f32 %v849
    %vm856 = vmor %vm854, %vm855
    %v857 = vsel %vm856, %v849, %v853
    %v858 = vand.u32 2147483647, %v848
    %vm859 = vcmp.eq.f32.partialorder %v858, 8.507059e+37
    %v860 = vand.u32 %v848, 2147483648
    %v861 = vor.u32 1.1754944e-38, %v860
    %v862 = vsel %vm859, %v861, %v857
    %v863 = vmul.f32 1.0, %v862
    %v864 = vadd.f32 %v821, %v475
    %v865 = vmul.f32 %v843, %v864
    %v866 = vadd.f32 %v781, %v865
    %v867 = vtanh.pop %v866
    %v868 = vsub.f32 1.0, %v863
    %v869 = vmul.f32 %v868, %v867
    %v870 = vmul.f32 %v863, %v742
    %v871 = vadd.f32 %v869, %v870
    %s872 = scalar_lea.vmem %s0, 16
    %v873 = vld [vmem:[%s872] sm:$0xf]
    %874 = vmatpush.bf16.msra.mxu0 %v169
    %875 = vmatpush.bf16.msra.mxu0 %v166
    %876 = vmatpush.bf16.msra.mxu0 %v163
    %877 = vmatpush.bf16.msra.mxu0 %v160
    %878 = vmatpush.bf16.msra.mxu0 %v157
    %879 = vmatpush.bf16.msra.mxu0 %v154
    %880 = vmatpush.bf16.msra.mxu0 %v151
    %881 = vmatpush.bf16.msra.mxu0 %v148
    %882 = vmatmul.bf16.gmra.mxu0 %v873
    %v883 = vpop.f32.mrf.mxu0
    %v884 = vadd.f32 0.0, %v883
    %v885 = vpop.f32.mrf.mxu0
    %886 = vdwg.mxu0
    %887 = vmatpush.bf16.msra.mxu0 %v170
    %888 = vmatpush.bf16.msra.mxu0 %v167
    %889 = vmatpush.bf16.msra.mxu0 %v164
    %890 = vmatpush.bf16.msra.mxu0 %v161
    %891 = vmatpush.bf16.msra.mxu0 %v158
    %892 = vmatpush.bf16.msra.mxu0 %v155
    %893 = vmatpush.bf16.msra.mxu0 %v152
    %894 = vmatpush.bf16.msra.mxu0 %v149
    %895 = vmatmul.bf16.gmra.mxu0 %v873
    %v896 = vpop.f32.mrf.mxu0
    %v897 = vadd.f32 0.0, %v896
    %v898 = vpop.f32.mrf.mxu0
    %899 = vdwg.mxu0
    %900 = vmatpush.bf16.msra.mxu0 %v171
    %901 = vmatpush.bf16.msra.mxu0 %v168
    %902 = vmatpush.bf16.msra.mxu0 %v165
    %903 = vmatpush.bf16.msra.mxu0 %v162
    %904 = vmatpush.bf16.msra.mxu0 %v159
    %905 = vmatpush.bf16.msra.mxu0 %v156
    %906 = vmatpush.bf16.msra.mxu0 %v153
    %907 = vmatpush.bf16.msra.mxu0 %v150
    %908 = vmatmul.bf16.gmra.mxu0 %v873
    %v909 = vpop.f32.mrf.mxu0
    %v910 = vadd.f32 0.0, %v909
    %v911 = vpop.f32.mrf.mxu0
    %912 = vdwg.mxu0
    %v913 = vpack.c.bf16 %v871, %v871
    %914 = vmatpush.bf16.msra.mxu0 %v368
    %915 = vmatpush.bf16.msra.mxu0 %v365
    %916 = vmatpush.bf16.msra.mxu0 %v362
    %917 = vmatpush.bf16.msra.mxu0 %v359
    %918 = vmatpush.bf16.msra.mxu0 %v356
    %919 = vmatpush.bf16.msra.mxu0 %v353
    %920 = vmatpush.bf16.msra.mxu0 %v350
    %921 = vmatpush.bf16.msra.mxu0 %v347
    %922 = vmatmul.bf16.gmra.mxu0 %v913
    %v923 = vpop.f32.mrf.mxu0
    %v924 = vadd.f32 0.0, %v923
    %v925 = vpop.f32.mrf.mxu0
    %926 = vdwg.mxu0
    %927 = vmatpush.bf16.msra.mxu0 %v369
    %928 = vmatpush.bf16.msra.mxu0 %v366
    %929 = vmatpush.bf16.msra.mxu0 %v363
    %930 = vmatpush.bf16.msra.mxu0 %v360
    %931 = vmatpush.bf16.msra.mxu0 %v357
    %932 = vmatpush.bf16.msra.mxu0 %v354
    %933 = vmatpush.bf16.msra.mxu0 %v351
    %934 = vmatpush.bf16.msra.mxu0 %v348
    %935 = vmatmul.bf16.gmra.mxu0 %v913
    %v936 = vpop.f32.mrf.mxu0
    %v937 = vadd.f32 0.0, %v936
    %v938 = vpop.f32.mrf.mxu0
    %939 = vdwg.mxu0
    %940 = vmatpush.bf16.msra.mxu0 %v370
    %941 = vmatpush.bf16.msra.mxu0 %v367
    %942 = vmatpush.bf16.msra.mxu0 %v364
    %943 = vmatpush.bf16.msra.mxu0 %v361
    %944 = vmatpush.bf16.msra.mxu0 %v358
    %945 = vmatpush.bf16.msra.mxu0 %v355
    %946 = vmatpush.bf16.msra.mxu0 %v352
    %947 = vmatpush.bf16.msra.mxu0 %v349
    %948 = vmatmul.bf16.gmra.mxu0 %v913
    %v949 = vpop.f32.mrf.mxu0
    %v950 = vadd.f32 0.0, %v949
    %v951 = vpop.f32.mrf.mxu0
    %952 = vdwg.mxu0
    %v953 = vadd.f32 %v884, %v924
    %v954 = vxor.u32 %v953, 2147483648
    %v955 = vmul.f32 %v954, 1.442695
    %v956 = vpow.pop %v955
    %v957 = vadd.f32 %v956, 1.0
    %v958 = vrcp.pop %v957
    %v959 = vmul.f32 %v957, %v958
    %v960 = vsub.f32 1.0, %v959
    %v961 = vmul.f32 %v958, %v960
    %v962 = vadd.f32 %v958, %v961
    %vm963 = vweird.f32 %v957
    %vm964 = vweird.f32 %v958
    %vm965 = vmor %vm963, %vm964
    %v966 = vsel %vm965, %v958, %v962
    %v967 = vand.u32 2147483647, %v957
    %vm968 = vcmp.eq.f32.partialorder %v967, 8.507059e+37
    %v969 = vand.u32 %v957, 2147483648
    %v970 = vor.u32 1.1754944e-38, %v969
    %v971 = vsel %vm968, %v970, %v966
    %v972 = vmul.f32 1.0, %v971
    %v973 = vadd.f32 %v897, %v937
    %v974 = vxor.u32 %v973, 2147483648
    %v975 = vmul.f32 %v974, 1.442695
    %v976 = vpow.pop %v975
    %v977 = vadd.f32 %v976, 1.0
    %v978 = vrcp.pop %v977
    %v979 = vmul.f32 %v977, %v978
    %v980 = vsub.f32 1.0, %v979
    %v981 = vmul.f32 %v978, %v980
    %v982 = vadd.f32 %v978, %v981
    %vm983 = vweird.f32 %v977
    %vm984 = vweird.f32 %v978
    %vm985 = vmor %vm983, %vm984
    %v986 = vsel %vm985, %v978, %v982
    %v987 = vand.u32 2147483647, %v977
    %vm988 = vcmp.eq.f32.partialorder %v987, 8.507059e+37
    %v989 = vand.u32 %v977, 2147483648
    %v990 = vor.u32 1.1754944e-38, %v989
    %v991 = vsel %vm988, %v990, %v986
    %v992 = vmul.f32 1.0, %v991
    %v993 = vadd.f32 %v950, %v475
    %v994 = vmul.f32 %v972, %v993
    %v995 = vadd.f32 %v910, %v994
    %v996 = vtanh.pop %v995
    %v997 = vsub.f32 1.0, %v992
    %v998 = vmul.f32 %v997, %v996
    %v999 = vmul.f32 %v992, %v871
    %v1000 = vadd.f32 %v998, %v999
    %s1001 = scalar_lea.vmem %s0, 20
    %v1002 = vld [vmem:[%s1001] sm:$0xf]
    %1003 = vmatpush.bf16.msra.mxu0 %v169
    %1004 = vmatpush.bf16.msra.mxu0 %v166
    %1005 = vmatpush.bf16.msra.mxu0 %v163
    %1006 = vmatpush.bf16.msra.mxu0 %v160
    %1007 = vmatpush.bf16.msra.mxu0 %v157
    %1008 = vmatpush.bf16.msra.mxu0 %v154
    %1009 = vmatpush.bf16.msra.mxu0 %v151
    %1010 = vmatpush.bf16.msra.mxu0 %v148
    %1011 = vmatmul.bf16.gmra.mxu0 %v1002
    %v1012 = vpop.f32.mrf.mxu0
    %v1013 = vadd.f32 0.0, %v1012
    %v1014 = vpop.f32.mrf.mxu0
    %1015 = vdwg.mxu0
    %1016 = vmatpush.bf16.msra.mxu0 %v170
    %1017 = vmatpush.bf16.msra.mxu0 %v167
    %1018 = vmatpush.bf16.msra.mxu0 %v164
    %1019 = vmatpush.bf16.msra.mxu0 %v161
    %1020 = vmatpush.bf16.msra.mxu0 %v158
    %1021 = vmatpush.bf16.msra.mxu0 %v155
    %1022 = vmatpush.bf16.msra.mxu0 %v152
    %1023 = vmatpush.bf16.msra.mxu0 %v149
    %1024 = vmatmul.bf16.gmra.mxu0 %v1002
    %v1025 = vpop.f32.mrf.mxu0
    %v1026 = vadd.f32 0.0, %v1025
    %v1027 = vpop.f32.mrf.mxu0
    %1028 = vdwg.mxu0
    %1029 = vmatpush.bf16.msra.mxu0 %v171
    %1030 = vmatpush.bf16.msra.mxu0 %v168
    %1031 = vmatpush.bf16.msra.mxu0 %v165
    %1032 = vmatpush.bf16.msra.mxu0 %v162
    %1033 = vmatpush.bf16.msra.mxu0 %v159
    %1034 = vmatpush.bf16.msra.mxu0 %v156
    %1035 = vmatpush.bf16.msra.mxu0 %v153
    %1036 = vmatpush.bf16.msra.mxu0 %v150
    %1037 = vmatmul.bf16.gmra.mxu0 %v1002
    %v1038 = vpop.f32.mrf.mxu0
    %v1039 = vadd.f32 0.0, %v1038
    %v1040 = vpop.f32.mrf.mxu0
    %1041 = vdwg.mxu0
    %v1042 = vpack.c.bf16 %v1000, %v1000
    %1043 = vmatpush.bf16.msra.mxu0 %v368
    %1044 = vmatpush.bf16.msra.mxu0 %v365
    %1045 = vmatpush.bf16.msra.mxu0 %v362
    %1046 = vmatpush.bf16.msra.mxu0 %v359
    %1047 = vmatpush.bf16.msra.mxu0 %v356
    %1048 = vmatpush.bf16.msra.mxu0 %v353
    %1049 = vmatpush.bf16.msra.mxu0 %v350
    %1050 = vmatpush.bf16.msra.mxu0 %v347
    %1051 = vmatmul.bf16.gmra.mxu0 %v1042
    %v1052 = vpop.f32.mrf.mxu0
    %v1053 = vadd.f32 0.0, %v1052
    %v1054 = vpop.f32.mrf.mxu0
    %1055 = vdwg.mxu0
    %1056 = vmatpush.bf16.msra.mxu0 %v369
    %1057 = vmatpush.bf16.msra.mxu0 %v366
    %1058 = vmatpush.bf16.msra.mxu0 %v363
    %1059 = vmatpush.bf16.msra.mxu0 %v360
    %1060 = vmatpush.bf16.msra.mxu0 %v357
    %1061 = vmatpush.bf16.msra.mxu0 %v354
    %1062 = vmatpush.bf16.msra.mxu0 %v351
    %1063 = vmatpush.bf16.msra.mxu0 %v348
    %1064 = vmatmul.bf16.gmra.mxu0 %v1042
    %v1065 = vpop.f32.mrf.mxu0
    %v1066 = vadd.f32 0.0, %v1065
    %v1067 = vpop.f32.mrf.mxu0
    %1068 = vdwg.mxu0
    %1069 = vmatpush.bf16.msra.mxu0 %v370
    %1070 = vmatpush.bf16.msra.mxu0 %v367
    %1071 = vmatpush.bf16.msra.mxu0 %v364
    %1072 = vmatpush.bf16.msra.mxu0 %v361
    %1073 = vmatpush.bf16.msra.mxu0 %v358
    %1074 = vmatpush.bf16.msra.mxu0 %v355
    %1075 = vmatpush.bf16.msra.mxu0 %v352
    %1076 = vmatpush.bf16.msra.mxu0 %v349
    %1077 = vmatmul.bf16.gmra.mxu0 %v1042
    %v1078 = vpop.f32.mrf.mxu0
    %v1079 = vadd.f32 0.0, %v1078
    %v1080 = vpop.f32.mrf.mxu0
    %1081 = vdwg.mxu0
    %v1082 = vadd.f32 %v1013, %v1053
    %v1083 = vxor.u32 %v1082, 2147483648
    %v1084 = vmul.f32 %v1083, 1.442695
    %v1085 = vpow.pop %v1084
    %v1086 = vadd.f32 %v1085, 1.0
    %v1087 = vrcp.pop %v1086
    %v1088 = vmul.f32 %v1086, %v1087
    %v1089 = vsub.f32 1.0, %v1088
    %v1090 = vmul.f32 %v1087, %v1089
    %v1091 = vadd.f32 %v1087, %v1090
    %vm1092 = vweird.f32 %v1086
    %vm1093 = vweird.f32 %v1087
    %vm1094 = vmor %vm1092, %vm1093
    %v1095 = vsel %vm1094, %v1087, %v1091
    %v1096 = vand.u32 2147483647, %v1086
    %vm1097 = vcmp.eq.f32.partialorder %v1096, 8.507059e+37
    %v1098 = vand.u32 %v1086, 2147483648
    %v1099 = vor.u32 1.1754944e-38, %v1098
    %v1100 = vsel %vm1097, %v1099, %v1095
    %v1101 = vmul.f32 1.0, %v1100
    %v1102 = vadd.f32 %v1026, %v1066
    %v1103 = vxor.u32 %v1102, 2147483648
    %v1104 = vmul.f32 %v1103, 1.442695
    %v1105 = vpow.pop %v1104
    %v1106 = vadd.f32 %v1105, 1.0
    %v1107 = vrcp.pop %v1106
    %v1108 = vmul.f32 %v1106, %v1107
    %v1109 = vsub.f32 1.0, %v1108
    %v1110 = vmul.f32 %v1107, %v1109
    %v1111 = vadd.f32 %v1107, %v1110
    %vm1112 = vweird.f32 %v1106
    %vm1113 = vweird.f32 %v1107
    %vm1114 = vmor %vm1112, %vm1113
    %v1115 = vsel %vm1114, %v1107, %v1111
    %v1116 = vand.u32 2147483647, %v1106
    %vm1117 = vcmp.eq.f32.partialorder %v1116, 8.507059e+37
    %v1118 = vand.u32 %v1106, 2147483648
    %v1119 = vor.u32 1.1754944e-38, %v1118
    %v1120 = vsel %vm1117, %v1119, %v1115
    %v1121 = vmul.f32 1.0, %v1120
    %v1122 = vadd.f32 %v1079, %v475
    %v1123 = vmul.f32 %v1101, %v1122
    %v1124 = vadd.f32 %v1039, %v1123
    %v1125 = vtanh.pop %v1124
    %v1126 = vsub.f32 1.0, %v1121
    %v1127 = vmul.f32 %v1126, %v1125
    %v1128 = vmul.f32 %v1121, %v1000
    %v1129 = vadd.f32 %v1127, %v1128
    %s1130 = scalar_lea.vmem %s0, 24
    %v1131 = vld [vmem:[%s1130] sm:$0xf]
    %1132 = vmatpush.bf16.msra.mxu0 %v169
    %1133 = vmatpush.bf16.msra.mxu0 %v166
    %1134 = vmatpush.bf16.msra.mxu0 %v163
    %1135 = vmatpush.bf16.msra.mxu0 %v160
    %1136 = vmatpush.bf16.msra.mxu0 %v157
    %1137 = vmatpush.bf16.msra.mxu0 %v154
    %1138 = vmatpush.bf16.msra.mxu0 %v151
    %1139 = vmatpush.bf16.msra.mxu0 %v148
    %1140 = vmatmul.bf16.gmra.mxu0 %v1131
    %v1141 = vpop.f32.mrf.mxu0
    %v1142 = vadd.f32 0.0, %v1141
    %v1143 = vpop.f32.mrf.mxu0
    %1144 = vdwg.mxu0
    %1145 = vmatpush.bf16.msra.mxu0 %v170
    %1146 = vmatpush.bf16.msra.mxu0 %v167
    %1147 = vmatpush.bf16.msra.mxu0 %v164
    %1148 = vmatpush.bf16.msra.mxu0 %v161
    %1149 = vmatpush.bf16.msra.mxu0 %v158
    %1150 = vmatpush.bf16.msra.mxu0 %v155
    %1151 = vmatpush.bf16.msra.mxu0 %v152
    %1152 = vmatpush.bf16.msra.mxu0 %v149
    %1153 = vmatmul.bf16.gmra.mxu0 %v1131
    %v1154 = vpop.f32.mrf.mxu0
    %v1155 = vadd.f32 0.0, %v1154
    %v1156 = vpop.f32.mrf.mxu0
    %1157 = vdwg.mxu0
    %1158 = vmatpush.bf16.msra.mxu0 %v171
    %1159 = vmatpush.bf16.msra.mxu0 %v168
    %1160 = vmatpush.bf16.msra.mxu0 %v165
    %1161 = vmatpush.bf16.msra.mxu0 %v162
    %1162 = vmatpush.bf16.msra.mxu0 %v159
    %1163 = vmatpush.bf16.msra.mxu0 %v156
    %1164 = vmatpush.bf16.msra.mxu0 %v153
    %1165 = vmatpush.bf16.msra.mxu0 %v150
    %1166 = vmatmul.bf16.gmra.mxu0 %v1131
    %v1167 = vpop.f32.mrf.mxu0
    %v1168 = vadd.f32 0.0, %v1167
    %v1169 = vpop.f32.mrf.mxu0
    %1170 = vdwg.mxu0
    %v1171 = vpack.c.bf16 %v1129, %v1129
    %1172 = vmatpush.bf16.msra.mxu0 %v368
    %1173 = vmatpush.bf16.msra.mxu0 %v365
    %1174 = vmatpush.bf16.msra.mxu0 %v362
    %1175 = vmatpush.bf16.msra.mxu0 %v359
    %1176 = vmatpush.bf16.msra.mxu0 %v356
    %1177 = vmatpush.bf16.msra.mxu0 %v353
    %1178 = vmatpush.bf16.msra.mxu0 %v350
    %1179 = vmatpush.bf16.msra.mxu0 %v347
    %1180 = vmatmul.bf16.gmra.mxu0 %v1171
    %v1181 = vpop.f32.mrf.mxu0
    %v1182 = vadd.f32 0.0, %v1181
    %v1183 = vpop.f32.mrf.mxu0
    %1184 = vdwg.mxu0
    %1185 = vmatpush.bf16.msra.mxu0 %v369
    %1186 = vmatpush.bf16.msra.mxu0 %v366
    %1187 = vmatpush.bf16.msra.mxu0 %v363
    %1188 = vmatpush.bf16.msra.mxu0 %v360
    %1189 = vmatpush.bf16.msra.mxu0 %v357
    %1190 = vmatpush.bf16.msra.mxu0 %v354
    %1191 = vmatpush.bf16.msra.mxu0 %v351
    %1192 = vmatpush.bf16.msra.mxu0 %v348
    %1193 = vmatmul.bf16.gmra.mxu0 %v1171
    %v1194 = vpop.f32.mrf.mxu0
    %v1195 = vadd.f32 0.0, %v1194
    %v1196 = vpop.f32.mrf.mxu0
    %1197 = vdwg.mxu0
    %1198 = vmatpush.bf16.msra.mxu0 %v370
    %1199 = vmatpush.bf16.msra.mxu0 %v367
    %1200 = vmatpush.bf16.msra.mxu0 %v364
    %1201 = vmatpush.bf16.msra.mxu0 %v361
    %1202 = vmatpush.bf16.msra.mxu0 %v358
    %1203 = vmatpush.bf16.msra.mxu0 %v355
    %1204 = vmatpush.bf16.msra.mxu0 %v352
    %1205 = vmatpush.bf16.msra.mxu0 %v349
    %1206 = vmatmul.bf16.gmra.mxu0 %v1171
    %v1207 = vpop.f32.mrf.mxu0
    %v1208 = vadd.f32 0.0, %v1207
    %v1209 = vpop.f32.mrf.mxu0
    %1210 = vdwg.mxu0
    %v1211 = vadd.f32 %v1142, %v1182
    %v1212 = vxor.u32 %v1211, 2147483648
    %v1213 = vmul.f32 %v1212, 1.442695
    %v1214 = vpow.pop %v1213
    %v1215 = vadd.f32 %v1214, 1.0
    %v1216 = vrcp.pop %v1215
    %v1217 = vmul.f32 %v1215, %v1216
    %v1218 = vsub.f32 1.0, %v1217
    %v1219 = vmul.f32 %v1216, %v1218
    %v1220 = vadd.f32 %v1216, %v1219
    %vm1221 = vweird.f32 %v1215
    %vm1222 = vweird.f32 %v1216
    %vm1223 = vmor %vm1221, %vm1222
    %v1224 = vsel %vm1223, %v1216, %v1220
    %v1225 = vand.u32 2147483647, %v1215
    %vm1226 = vcmp.eq.f32.partialorder %v1225, 8.507059e+37
    %v1227 = vand.u32 %v1215, 2147483648
    %v1228 = vor.u32 1.1754944e-38, %v1227
    %v1229 = vsel %vm1226, %v1228, %v1224
    %v1230 = vmul.f32 1.0, %v1229
    %v1231 = vadd.f32 %v1155, %v1195
    %v1232 = vxor.u32 %v1231, 2147483648
    %v1233 = vmul.f32 %v1232, 1.442695
    %v1234 = vpow.pop %v1233
    %v1235 = vadd.f32 %v1234, 1.0
    %v1236 = vrcp.pop %v1235
    %v1237 = vmul.f32 %v1235, %v1236
    %v1238 = vsub.f32 1.0, %v1237
    %v1239 = vmul.f32 %v1236, %v1238
    %v1240 = vadd.f32 %v1236, %v1239
    %vm1241 = vweird.f32 %v1235
    %vm1242 = vweird.f32 %v1236
    %vm1243 = vmor %vm1241, %vm1242
    %v1244 = vsel %vm1243, %v1236, %v1240
    %v1245 = vand.u32 2147483647, %v1235
    %vm1246 = vcmp.eq.f32.partialorder %v1245, 8.507059e+37
    %v1247 = vand.u32 %v1235, 2147483648
    %v1248 = vor.u32 1.1754944e-38, %v1247
    %v1249 = vsel %vm1246, %v1248, %v1244
    %v1250 = vmul.f32 1.0, %v1249
    %v1251 = vadd.f32 %v1208, %v475
    %v1252 = vmul.f32 %v1230, %v1251
    %v1253 = vadd.f32 %v1168, %v1252
    %v1254 = vtanh.pop %v1253
    %v1255 = vsub.f32 1.0, %v1250
    %v1256 = vmul.f32 %v1255, %v1254
    %v1257 = vmul.f32 %v1250, %v1129
    %v1258 = vadd.f32 %v1256, %v1257
    %s1259 = scalar_lea.vmem %s0, 28
    %v1260 = vld [vmem:[%s1259] sm:$0xf]
    %1261 = vmatpush.bf16.msra.mxu0 %v169
    %1262 = vmatpush.bf16.msra.mxu0 %v166
    %1263 = vmatpush.bf16.msra.mxu0 %v163
    %1264 = vmatpush.bf16.msra.mxu0 %v160
    %1265 = vmatpush.bf16.msra.mxu0 %v157
    %1266 = vmatpush.bf16.msra.mxu0 %v154
    %1267 = vmatpush.bf16.msra.mxu0 %v151
    %1268 = vmatpush.bf16.msra.mxu0 %v148
    %1269 = vmatmul.bf16.gmra.mxu0 %v1260
    %v1270 = vpop.f32.mrf.mxu0
    %v1271 = vadd.f32 0.0, %v1270
    %v1272 = vpop.f32.mrf.mxu0
    %1273 = vdwg.mxu0
    %1274 = vmatpush.bf16.msra.mxu0 %v170
    %1275 = vmatpush.bf16.msra.mxu0 %v167
    %1276 = vmatpush.bf16.msra.mxu0 %v164
    %1277 = vmatpush.bf16.msra.mxu0 %v161
    %1278 = vmatpush.bf16.msra.mxu0 %v158
    %1279 = vmatpush.bf16.msra.mxu0 %v155
    %1280 = vmatpush.bf16.msra.mxu0 %v152
    %1281 = vmatpush.bf16.msra.mxu0 %v149
    %1282 = vmatmul.bf16.gmra.mxu0 %v1260
    %v1283 = vpop.f32.mrf.mxu0
    %v1284 = vadd.f32 0.0, %v1283
    %v1285 = vpop.f32.mrf.mxu0
    %1286 = vdwg.mxu0
    %1287 = vmatpush.bf16.msra.mxu0 %v171
    %1288 = vmatpush.bf16.msra.mxu0 %v168
    %1289 = vmatpush.bf16.msra.mxu0 %v165
    %1290 = vmatpush.bf16.msra.mxu0 %v162
    %1291 = vmatpush.bf16.msra.mxu0 %v159
    %1292 = vmatpush.bf16.msra.mxu0 %v156
    %1293 = vmatpush.bf16.msra.mxu0 %v153
    %1294 = vmatpush.bf16.msra.mxu0 %v150
    %1295 = vmatmul.bf16.gmra.mxu0 %v1260
    %v1296 = vpop.f32.mrf.mxu0
    %v1297 = vadd.f32 0.0, %v1296
    %v1298 = vpop.f32.mrf.mxu0
    %1299 = vdwg.mxu0
    %v1300 = vpack.c.bf16 %v1258, %v1258
    %1301 = vmatpush.bf16.msra.mxu0 %v368
    %1302 = vmatpush.bf16.msra.mxu0 %v365
    %1303 = vmatpush.bf16.msra.mxu0 %v362
    %1304 = vmatpush.bf16.msra.mxu0 %v359
    %1305 = vmatpush.bf16.msra.mxu0 %v356
    %1306 = vmatpush.bf16.msra.mxu0 %v353
    %1307 = vmatpush.bf16.msra.mxu0 %v350
    %1308 = vmatpush.bf16.msra.mxu0 %v347
    %1309 = vmatmul.bf16.gmra.mxu0 %v1300
    %v1310 = vpop.f32.mrf.mxu0
    %v1311 = vadd.f32 0.0, %v1310
    %v1312 = vpop.f32.mrf.mxu0
    %1313 = vdwg.mxu0
    %1314 = vmatpush.bf16.msra.mxu0 %v369
    %1315 = vmatpush.bf16.msra.mxu0 %v366
    %1316 = vmatpush.bf16.msra.mxu0 %v363
    %1317 = vmatpush.bf16.msra.mxu0 %v360
    %1318 = vmatpush.bf16.msra.mxu0 %v357
    %1319 = vmatpush.bf16.msra.mxu0 %v354
    %1320 = vmatpush.bf16.msra.mxu0 %v351
    %1321 = vmatpush.bf16.msra.mxu0 %v348
    %1322 = vmatmul.bf16.gmra.mxu0 %v1300
    %v1323 = vpop.f32.mrf.mxu0
    %v1324 = vadd.f32 0.0, %v1323
    %v1325 = vpop.f32.mrf.mxu0
    %1326 = vdwg.mxu0
    %1327 = vmatpush.bf16.msra.mxu0 %v370
    %1328 = vmatpush.bf16.msra.mxu0 %v367
    %1329 = vmatpush.bf16.msra.mxu0 %v364
    %1330 = vmatpush.bf16.msra.mxu0 %v361
    %1331 = vmatpush.bf16.msra.mxu0 %v358
    %1332 = vmatpush.bf16.msra.mxu0 %v355
    %1333 = vmatpush.bf16.msra.mxu0 %v352
    %1334 = vmatpush.bf16.msra.mxu0 %v349
    %1335 = vmatmul.bf16.gmra.mxu0 %v1300
    %v1336 = vpop.f32.mrf.mxu0
    %v1337 = vadd.f32 0.0, %v1336
    %v1338 = vpop.f32.mrf.mxu0
    %1339 = vdwg.mxu0
    %v1340 = vadd.f32 %v1271, %v1311
    %v1341 = vxor.u32 %v1340, 2147483648
    %v1342 = vmul.f32 %v1341, 1.442695
    %v1343 = vpow.pop %v1342
    %v1344 = vadd.f32 %v1343, 1.0
    %v1345 = vrcp.pop %v1344
    %v1346 = vmul.f32 %v1344, %v1345
    %v1347 = vsub.f32 1.0, %v1346
    %v1348 = vmul.f32 %v1345, %v1347
    %v1349 = vadd.f32 %v1345, %v1348
    %vm1350 = vweird.f32 %v1344
    %vm1351 = vweird.f32 %v1345
    %vm1352 = vmor %vm1350, %vm1351
    %v1353 = vsel %vm1352, %v1345, %v1349
    %v1354 = vand.u32 2147483647, %v1344
    %vm1355 = vcmp.eq.f32.partialorder %v1354, 8.507059e+37
    %v1356 = vand.u32 %v1344, 2147483648
    %v1357 = vor.u32 1.1754944e-38, %v1356
    %v1358 = vsel %vm1355, %v1357, %v1353
    %v1359 = vmul.f32 1.0, %v1358
    %v1360 = vadd.f32 %v1284, %v1324
    %v1361 = vxor.u32 %v1360, 2147483648
    %v1362 = vmul.f32 %v1361, 1.442695
    %v1363 = vpow.pop %v1362
    %v1364 = vadd.f32 %v1363, 1.0
    %v1365 = vrcp.pop %v1364
    %v1366 = vmul.f32 %v1364, %v1365
    %v1367 = vsub.f32 1.0, %v1366
    %v1368 = vmul.f32 %v1365, %v1367
    %v1369 = vadd.f32 %v1365, %v1368
    %vm1370 = vweird.f32 %v1364
    %vm1371 = vweird.f32 %v1365
    %vm1372 = vmor %vm1370, %vm1371
    %v1373 = vsel %vm1372, %v1365, %v1369
    %v1374 = vand.u32 2147483647, %v1364
    %vm1375 = vcmp.eq.f32.partialorder %v1374, 8.507059e+37
    %v1376 = vand.u32 %v1364, 2147483648
    %v1377 = vor.u32 1.1754944e-38, %v1376
    %v1378 = vsel %vm1375, %v1377, %v1373
    %v1379 = vmul.f32 1.0, %v1378
    %v1380 = vadd.f32 %v1337, %v475
    %v1381 = vmul.f32 %v1359, %v1380
    %v1382 = vadd.f32 %v1297, %v1381
    %v1383 = vtanh.pop %v1382
    %v1384 = vsub.f32 1.0, %v1379
    %v1385 = vmul.f32 %v1384, %v1383
    %v1386 = vmul.f32 %v1379, %v1258
    %v1387 = vadd.f32 %v1385, %v1386
    %1388 = vst [vmem:[%s4] sm:$0xff] %v1387
    // Predicated region
    $region22: #{rnn_block_forward.1} parent=1 // pred_check
      _
    $region23: #{rnn_block_forward.1} parent=1 // pred_check_branch
      %1390 = sbr.rel (0) target = $region25
    $region24: #{rnn_block_forward.1} parent=1 // pred_region
      _
    $region25: #{rnn_block_forward.1} parent=1 // pred_fallthru
      _
    // Predicated region
    $region26: #{rnn_block_forward.1} parent=1 // pred_check
      _
    $region27: #{rnn_block_forward.1} parent=1 // pred_check_branch
      %1392 = sbr.rel (0) target = $region29
    $region28: #{rnn_block_forward.1} parent=1 // pred_region
      _
    $region29: #{rnn_block_forward.1} parent=1 // pred_fallthru
      _
    %1393 = vsyncpa [#allocation3], 1

</llo_original>
